<compile_context>
chip_gen: v7x
topology: tpu7x:2x2x1
jax: 0.10.0
libtpu: 0.0.40
codegen_flags: <defaults>
</compile_context>

<pallas_src>
import functools

import jax
import jax.numpy as jnp
from jax.experimental import pallas as pl


# ---------------------------------------------------------------------------
# Fused kernel: whole Pseudo_MultiHeadSelfAttention forward in one call.
# ---------------------------------------------------------------------------
def _pseudo_mhsa_kernel(x_ref, wp_ref, wa_ref, wv_ref, wo_ref, bo_ref,
                        out_ref, probs_ref, *,
                        batch, seq, num_heads, head_dim):
    B, S, H, dh = batch, seq, num_heads, head_dim
    E = H * dh

    xf = x_ref[...]                                               # (B*S, E)

    # einsum('bse,end->bsnd') as one full-width MXU matmul.
    xp = jnp.dot(xf, wp_ref[...], preferred_element_type=jnp.float32)
    # Per-head attn / value projections via block-diagonal weights
    # (1/head_dim is already folded into wa by the glue code).
    xa = jnp.dot(xp, wa_ref[...], preferred_element_type=jnp.float32)
    xv = jnp.dot(xp, wv_ref[...], preferred_element_type=jnp.float32)

    # Leading-dim-only reshapes (lane dim unchanged) -> layout-preserving.
    xp3 = xp.reshape(B, S, E)
    xa3 = xa.reshape(B, S, E)
    xv3 = xv.reshape(B, S, E)

    wo = wo_ref[...]                                              # (E, E)
    acc = jnp.zeros((B * S, E), jnp.float32)

    # Static (unrolled) head loop; every matmul inside is batched over B.
    for h in range(H):
        lo = h * dh
        xa_h = xa3[:, :, lo:lo + dh]                              # (B, S, dh)
        xp_h = xp3[:, :, lo:lo + dh]                              # (B, S, dh)
        xv_h = xv3[:, :, lo:lo + dh]                              # (B, S, dh)

        # scores[b,q,k] = sum_d xa_h[b,q,d] * xp_h[b,k,d]   (1/head_dim folded)
        s = jnp.einsum('bqd,bkd->bqk', xa_h, xp_h,
                       preferred_element_type=jnp.float32)        # (B, S, S)
        s = s - jnp.max(s, axis=-1, keepdims=True)
        p = jnp.exp(s)
        p = p * pl.reciprocal(jnp.sum(p, axis=-1, keepdims=True), approx=True)

        # Second module output, already in (head, batch, q, k) order.
        probs_ref[h] = p.astype(probs_ref.dtype)

        # TODO(synk): attn_dropout is identity here (eval mode); training-mode
        # dropout on `p` would need pltpu.prng_* inside the kernel.
        o_h = jnp.einsum('bqk,bkd->bqd', p, xv_h,
                         preferred_element_type=jnp.float32)      # (B, S, dh)

        # Fused head-concat + out_project: accumulate against Wo's head slab.
        acc = acc + jnp.dot(o_h.reshape(B * S, dh), wo[lo:lo + dh, :],
                            preferred_element_type=jnp.float32)

    out_ref[...] = (acc + bo_ref[...]).astype(out_ref.dtype)


# ---------------------------------------------------------------------------
# Glue: weight re-layout (pure XLA, done once per call) + the pallas_call.
# ---------------------------------------------------------------------------
def _block_diag(w):
    """(H, d, d) per-head weights -> (H*d, H*d) block-diagonal matrix."""
    H, d, _ = w.shape
    eye = jnp.eye(H, dtype=w.dtype)
    return jnp.einsum('ndh,nm->ndmh', w, eye).reshape(H * d, H * d)


def pseudo_mhsa_forward(x, params, *, num_heads):
    """Eval-mode forward of Pseudo_MultiHeadSelfAttention.

    Returns:
      attn_output: (B, S, E)
      attn_probs:  (B, H, S, S)  (softmax weights, pre-dropout, permuted)
    """
    B, S, E = x.shape
    H = num_heads
    dh = E // H
    assert dh * H == E, "model_dim must be divisible by num_heads"

    proj_w = params["proj_weight"]      # (E, H, dh)
    attn_w = params["attn_weight"]      # (H, dh, dh)
    value_w = params["value_weight"]    # (H, dh, dh)
    out_w = params["out_w"]             # (E, E), applied as x @ out_w
    out_b = params["out_b"]             # (E,)

    wp2 = proj_w.reshape(E, E)                          # per-head proj as one matmul
    wa_bd = _block_diag(attn_w / dh).astype(x.dtype)    # 1/head_dim folded in
    wv_bd = _block_diag(value_w).astype(x.dtype)
    bo = out_b.reshape(1, E)
    xf = x.reshape(B * S, E)                            # fold batch into rows

    kern = functools.partial(_pseudo_mhsa_kernel, batch=B, seq=S,
                             num_heads=H, head_dim=dh)
    out_flat, probs_hb = pl.pallas_call(
        kern,
        out_shape=(jax.ShapeDtypeStruct((B * S, E), x.dtype),
                   jax.ShapeDtypeStruct((H, B, S, S), x.dtype)),
    )(xf, wp2, wa_bd, wv_bd, out_w, bo)

    attn_output = out_flat.reshape(B, S, E)
    attn_probs = jnp.swapaxes(probs_hb, 0, 1)           # (B, H, S, S)
    return attn_output, attn_probs


# ---------------------------------------------------------------------------
if __name__ == "__main__":
    B, S, E, H = 2, 16, 128, 4            # batch, seq, model_dim, num_heads
    dh = E // H

    key = jax.random.PRNGKey(0)
    k_proj, k_attn, k_val, k_out, k_x = jax.random.split(key, 5)

    params = {
        # matches reset_parameters(): std = 1 / sqrt(model_dim)
        "proj_weight": (jax.random.normal(k_proj, (E, H, dh))
                        / (E ** 0.5)).astype(jnp.float32),
        "attn_weight": (0.02 * jax.random.normal(k_attn, (H, dh, dh))
                        ).astype(jnp.float32),
        "value_weight": (0.02 * jax.random.normal(k_val, (H, dh, dh))
                         ).astype(jnp.float32),
        # out_project (nn.Linear) weight stored pre-transposed: applied as x @ W
        "out_w": ((1.0 / (E ** 0.5)) * jax.random.normal(k_out, (E, E))
                  ).astype(jnp.float32),
        "out_b": jnp.zeros((E,), jnp.float32),
    }
    x = jax.random.normal(k_x, (B, S, E), dtype=jnp.float32)

    fwd = jax.jit(functools.partial(pseudo_mhsa_forward, num_heads=H))
    attn_output, attn_probs = fwd(x, params)
    jax.block_until_ready((attn_output, attn_probs))

    assert attn_output.shape == (B, S, E)
    assert attn_probs.shape == (B, H, S, S)
    assert bool(jnp.all(jnp.isfinite(attn_output)))
    assert bool(jnp.all(jnp.isfinite(attn_probs)))
    print("KERNEL_OK")
</pallas_src>

<mosaic_0001>
module attributes {stable_mosaic.version = 11 : i64} {
  func.func @_pseudo_mhsa_kernel(%arg0: memref<32x128xf32, #tpu.memory_space<vmem>>, %arg1: memref<128x128xf32, #tpu.memory_space<vmem>>, %arg2: memref<128x128xf32, #tpu.memory_space<vmem>>, %arg3: memref<128x128xf32, #tpu.memory_space<vmem>>, %arg4: memref<128x128xf32, #tpu.memory_space<vmem>>, %arg5: memref<1x128xf32, #tpu.memory_space<vmem>>, %arg6: memref<32x128xf32, #tpu.memory_space<vmem>>, %arg7: memref<4x2x16x16xf32, #tpu.memory_space<vmem>>) attributes {dimension_semantics = [], scalar_prefetch = 0 : i64, scratch_operands = 0 : i64, tpu.core_type = #tpu.core_type<tc>} {
    %c0 = arith.constant 0 : index
    %c0_0 = arith.constant 0 : index
    %0 = vector.load %arg0[%c0, %c0_0] : memref<32x128xf32, #tpu.memory_space<vmem>>, vector<32x128xf32>
    %c0_1 = arith.constant 0 : index
    %c0_2 = arith.constant 0 : index
    %1 = vector.load %arg1[%c0_1, %c0_2] : memref<128x128xf32, #tpu.memory_space<vmem>>, vector<128x128xf32>
    %cst = arith.constant dense<0.000000e+00> : vector<32x128xf32>
    %2 = tpu.matmul %0, %1, %cst {dimension_numbers = #tpu.dot_dimension_numbers<[1], [0], [0], [1], [0, 0, 1, 1], [], []>} : vector<32x128xf32>, vector<128x128xf32>, vector<32x128xf32> -> vector<32x128xf32>
    %c0_3 = arith.constant 0 : index
    %c0_4 = arith.constant 0 : index
    %3 = vector.load %arg2[%c0_3, %c0_4] : memref<128x128xf32, #tpu.memory_space<vmem>>, vector<128x128xf32>
    %cst_5 = arith.constant dense<0.000000e+00> : vector<32x128xf32>
    %4 = tpu.matmul %2, %3, %cst_5 {dimension_numbers = #tpu.dot_dimension_numbers<[1], [0], [0], [1], [0, 0, 1, 1], [], []>} : vector<32x128xf32>, vector<128x128xf32>, vector<32x128xf32> -> vector<32x128xf32>
    %c0_6 = arith.constant 0 : index
    %c0_7 = arith.constant 0 : index
    %5 = vector.load %arg3[%c0_6, %c0_7] : memref<128x128xf32, #tpu.memory_space<vmem>>, vector<128x128xf32>
    %cst_8 = arith.constant dense<0.000000e+00> : vector<32x128xf32>
    %6 = tpu.matmul %2, %5, %cst_8 {dimension_numbers = #tpu.dot_dimension_numbers<[1], [0], [0], [1], [0, 0, 1, 1], [], []>} : vector<32x128xf32>, vector<128x128xf32>, vector<32x128xf32> -> vector<32x128xf32>
    %7 = vector.shape_cast %2 : vector<32x128xf32> to vector<2x16x128xf32>
    %8 = vector.shape_cast %4 : vector<32x128xf32> to vector<2x16x128xf32>
    %9 = vector.shape_cast %6 : vector<32x128xf32> to vector<2x16x128xf32>
    %c0_9 = arith.constant 0 : index
    %c0_10 = arith.constant 0 : index
    %10 = vector.load %arg4[%c0_9, %c0_10] : memref<128x128xf32, #tpu.memory_space<vmem>>, vector<128x128xf32>
    %cst_11 = arith.constant 0.000000e+00 : f32
    %11 = vector.broadcast %cst_11 : f32 to vector<32x128xf32>
    %12 = vector.extract_strided_slice %8 {offsets = [0, 0, 0], sizes = [2, 16, 32], strides = [1, 1, 1]} : vector<2x16x128xf32> to vector<2x16x32xf32>
    %13 = vector.extract_strided_slice %7 {offsets = [0, 0, 0], sizes = [2, 16, 32], strides = [1, 1, 1]} : vector<2x16x128xf32> to vector<2x16x32xf32>
    %14 = vector.extract_strided_slice %9 {offsets = [0, 0, 0], sizes = [2, 16, 32], strides = [1, 1, 1]} : vector<2x16x128xf32> to vector<2x16x32xf32>
    "tpu.trace_start"() <{level = 10 : i32, message = "bqd,bkd->bqk"}> : () -> ()
    %cst_12 = arith.constant dense<0.000000e+00> : vector<2x16x16xf32>
    %15 = tpu.matmul %12, %13, %cst_12 {dimension_numbers = #tpu.dot_dimension_numbers<[2], [2], [1], [1], [0, 0, 0, 1, 1, 1], [0], [0]>} : vector<2x16x32xf32>, vector<2x16x32xf32>, vector<2x16x16xf32> -> vector<2x16x16xf32>
    "tpu.trace_stop"() : () -> ()
    %cst_13 = arith.constant dense<0xFF800000> : vector<2x16xf32>
    %16 = vector.multi_reduction <maximumf>, %15, %cst_13 [2] : vector<2x16x16xf32> to vector<2x16xf32>
    %17 = vector.shape_cast %16 : vector<2x16xf32> to vector<2x16x1xf32>
    %18 = vector.broadcast %17 : vector<2x16x1xf32> to vector<2x16x16xf32>
    %19 = arith.subf %15, %18 : vector<2x16x16xf32>
    %20 = math.exp %19 : vector<2x16x16xf32>
    %cst_14 = arith.constant dense<0.000000e+00> : vector<2x16xf32>
    %21 = vector.multi_reduction <add>, %20, %cst_14 [2] : vector<2x16x16xf32> to vector<2x16xf32>
    %22 = vector.shape_cast %21 : vector<2x16xf32> to vector<2x16x1xf32>
    %23 = tpu.reciprocal %22 {approx = true} : vector<2x16x1xf32> -> vector<2x16x1xf32>
    %24 = vector.broadcast %23 : vector<2x16x1xf32> to vector<2x16x16xf32>
    %25 = arith.mulf %20, %24 : vector<2x16x16xf32>
    %c0_15 = arith.constant 0 : index
    %c0_16 = arith.constant 0 : index
    %c0_17 = arith.constant 0 : index
    %c0_18 = arith.constant 0 : index
    %26 = vector.load %arg7[%c0_15, %c0_16, %c0_17, %c0_18] : memref<4x2x16x16xf32, #tpu.memory_space<vmem>>, vector<1x2x16x16xf32>
    %27 = vector.shape_cast %26 : vector<1x2x16x16xf32> to vector<2x16x16xf32>
    %28 = vector.shape_cast %25 : vector<2x16x16xf32> to vector<1x2x16x16xf32>
    tpu.vector_store %arg7[%c0_15, %c0_16, %c0_17, %c0_18], %28 {strides = array<i32>} : memref<4x2x16x16xf32, #tpu.memory_space<vmem>>, vector<1x2x16x16xf32>,
    "tpu.trace_start"() <{level = 10 : i32, message = "bqk,bkd->bqd"}> : () -> ()
    %cst_19 = arith.constant dense<0.000000e+00> : vector<2x16x32xf32>
    %29 = tpu.matmul %25, %14, %cst_19 {dimension_numbers = #tpu.dot_dimension_numbers<[2], [1], [1], [2], [0, 0, 0, 1, 1, 2], [0], [0]>} : vector<2x16x16xf32>, vector<2x16x32xf32>, vector<2x16x32xf32> -> vector<2x16x32xf32>
    "tpu.trace_stop"() : () -> ()
    %30 = vector.shape_cast %29 : vector<2x16x32xf32> to vector<32x32xf32>
    %31 = vector.extract_strided_slice %10 {offsets = [0, 0], sizes = [32, 128], strides = [1, 1]} : vector<128x128xf32> to vector<32x128xf32>
    %cst_20 = arith.constant dense<0.000000e+00> : vector<32x128xf32>
    %32 = tpu.matmul %30, %31, %cst_20 {dimension_numbers = #tpu.dot_dimension_numbers<[1], [0], [0], [1], [0, 0, 1, 1], [], []>} : vector<32x32xf32>, vector<32x128xf32>, vector<32x128xf32> -> vector<32x128xf32>
    %33 = arith.addf %11, %32 : vector<32x128xf32>
    %34 = vector.extract_strided_slice %8 {offsets = [0, 0, 32], sizes = [2, 16, 32], strides = [1, 1, 1]} : vector<2x16x128xf32> to vector<2x16x32xf32>
    %35 = vector.extract_strided_slice %7 {offsets = [0, 0, 32], sizes = [2, 16, 32], strides = [1, 1, 1]} : vector<2x16x128xf32> to vector<2x16x32xf32>
    %36 = vector.extract_strided_slice %9 {offsets = [0, 0, 32], sizes = [2, 16, 32], strides = [1, 1, 1]} : vector<2x16x128xf32> to vector<2x16x32xf32>
    "tpu.trace_start"() <{level = 10 : i32, message = "bqd,bkd->bqk"}> : () -> ()
    %cst_21 = arith.constant dense<0.000000e+00> : vector<2x16x16xf32>
    %37 = tpu.matmul %34, %35, %cst_21 {dimension_numbers = #tpu.dot_dimension_numbers<[2], [2], [1], [1], [0, 0, 0, 1, 1, 1], [0], [0]>} : vector<2x16x32xf32>, vector<2x16x32xf32>, vector<2x16x16xf32> -> vector<2x16x16xf32>
    "tpu.trace_stop"() : () -> ()
    %cst_22 = arith.constant dense<0xFF800000> : vector<2x16xf32>
    %38 = vector.multi_reduction <maximumf>, %37, %cst_22 [2] : vector<2x16x16xf32> to vector<2x16xf32>
    %39 = vector.shape_cast %38 : vector<2x16xf32> to vector<2x16x1xf32>
    %40 = vector.broadcast %39 : vector<2x16x1xf32> to vector<2x16x16xf32>
    %41 = arith.subf %37, %40 : vector<2x16x16xf32>
    %42 = math.exp %41 : vector<2x16x16xf32>
    %cst_23 = arith.constant dense<0.000000e+00> : vector<2x16xf32>
    %43 = vector.multi_reduction <add>, %42, %cst_23 [2] : vector<2x16x16xf32> to vector<2x16xf32>
    %44 = vector.shape_cast %43 : vector<2x16xf32> to vector<2x16x1xf32>
    %45 = tpu.reciprocal %44 {approx = true} : vector<2x16x1xf32> -> vector<2x16x1xf32>
    %46 = vector.broadcast %45 : vector<2x16x1xf32> to vector<2x16x16xf32>
    %47 = arith.mulf %42, %46 : vector<2x16x16xf32>
    %c1 = arith.constant 1 : index
    %c0_24 = arith.constant 0 : index
    %c0_25 = arith.constant 0 : index
    %c0_26 = arith.constant 0 : index
    %48 = vector.load %arg7[%c1, %c0_24, %c0_25, %c0_26] : memref<4x2x16x16xf32, #tpu.memory_space<vmem>>, vector<1x2x16x16xf32>
    %49 = vector.shape_cast %48 : vector<1x2x16x16xf32> to vector<2x16x16xf32>
    %50 = vector.shape_cast %47 : vector<2x16x16xf32> to vector<1x2x16x16xf32>
    tpu.vector_store %arg7[%c1, %c0_24, %c0_25, %c0_26], %50 {strides = array<i32>} : memref<4x2x16x16xf32, #tpu.memory_space<vmem>>, vector<1x2x16x16xf32>,
    "tpu.trace_start"() <{level = 10 : i32, message = "bqk,bkd->bqd"}> : () -> ()
    %cst_27 = arith.constant dense<0.000000e+00> : vector<2x16x32xf32>
    %51 = tpu.matmul %47, %36, %cst_27 {dimension_numbers = #tpu.dot_dimension_numbers<[2], [1], [1], [2], [0, 0, 0, 1, 1, 2], [0], [0]>} : vector<2x16x16xf32>, vector<2x16x32xf32>, vector<2x16x32xf32> -> vector<2x16x32xf32>
    "tpu.trace_stop"() : () -> ()
    %52 = vector.shape_cast %51 : vector<2x16x32xf32> to vector<32x32xf32>
    %53 = vector.extract_strided_slice %10 {offsets = [32, 0], sizes = [32, 128], strides = [1, 1]} : vector<128x128xf32> to vector<32x128xf32>
    %cst_28 = arith.constant dense<0.000000e+00> : vector<32x128xf32>
    %54 = tpu.matmul %52, %53, %cst_28 {dimension_numbers = #tpu.dot_dimension_numbers<[1], [0], [0], [1], [0, 0, 1, 1], [], []>} : vector<32x32xf32>, vector<32x128xf32>, vector<32x128xf32> -> vector<32x128xf32>
    %55 = arith.addf %33, %54 : vector<32x128xf32>
    %56 = vector.extract_strided_slice %8 {offsets = [0, 0, 64], sizes = [2, 16, 32], strides = [1, 1, 1]} : vector<2x16x128xf32> to vector<2x16x32xf32>
    %57 = vector.extract_strided_slice %7 {offsets = [0, 0, 64], sizes = [2, 16, 32], strides = [1, 1, 1]} : vector<2x16x128xf32> to vector<2x16x32xf32>
    %58 = vector.extract_strided_slice %9 {offsets = [0, 0, 64], sizes = [2, 16, 32], strides = [1, 1, 1]} : vector<2x16x128xf32> to vector<2x16x32xf32>
    "tpu.trace_start"() <{level = 10 : i32, message = "bqd,bkd->bqk"}> : () -> ()
    %cst_29 = arith.constant dense<0.000000e+00> : vector<2x16x16xf32>
    %59 = tpu.matmul %56, %57, %cst_29 {dimension_numbers = #tpu.dot_dimension_numbers<[2], [2], [1], [1], [0, 0, 0, 1, 1, 1], [0], [0]>} : vector<2x16x32xf32>, vector<2x16x32xf32>, vector<2x16x16xf32> -> vector<2x16x16xf32>
    "tpu.trace_stop"() : () -> ()
    %cst_30 = arith.constant dense<0xFF800000> : vector<2x16xf32>
    %60 = vector.multi_reduction <maximumf>, %59, %cst_30 [2] : vector<2x16x16xf32> to vector<2x16xf32>
    %61 = vector.shape_cast %60 : vector<2x16xf32> to vector<2x16x1xf32>
    %62 = vector.broadcast %61 : vector<2x16x1xf32> to vector<2x16x16xf32>
    %63 = arith.subf %59, %62 : vector<2x16x16xf32>
    %64 = math.exp %63 : vector<2x16x16xf32>
    %cst_31 = arith.constant dense<0.000000e+00> : vector<2x16xf32>
    %65 = vector.multi_reduction <add>, %64, %cst_31 [2] : vector<2x16x16xf32> to vector<2x16xf32>
    %66 = vector.shape_cast %65 : vector<2x16xf32> to vector<2x16x1xf32>
    %67 = tpu.reciprocal %66 {approx = true} : vector<2x16x1xf32> -> vector<2x16x1xf32>
    %68 = vector.broadcast %67 : vector<2x16x1xf32> to vector<2x16x16xf32>
    %69 = arith.mulf %64, %68 : vector<2x16x16xf32>
    %c2 = arith.constant 2 : index
    %c0_32 = arith.constant 0 : index
    %c0_33 = arith.constant 0 : index
    %c0_34 = arith.constant 0 : index
    %70 = vector.load %arg7[%c2, %c0_32, %c0_33, %c0_34] : memref<4x2x16x16xf32, #tpu.memory_space<vmem>>, vector<1x2x16x16xf32>
    %71 = vector.shape_cast %70 : vector<1x2x16x16xf32> to vector<2x16x16xf32>
    %72 = vector.shape_cast %69 : vector<2x16x16xf32> to vector<1x2x16x16xf32>
    tpu.vector_store %arg7[%c2, %c0_32, %c0_33, %c0_34], %72 {strides = array<i32>} : memref<4x2x16x16xf32, #tpu.memory_space<vmem>>, vector<1x2x16x16xf32>,
    "tpu.trace_start"() <{level = 10 : i32, message = "bqk,bkd->bqd"}> : () -> ()
    %cst_35 = arith.constant dense<0.000000e+00> : vector<2x16x32xf32>
    %73 = tpu.matmul %69, %58, %cst_35 {dimension_numbers = #tpu.dot_dimension_numbers<[2], [1], [1], [2], [0, 0, 0, 1, 1, 2], [0], [0]>} : vector<2x16x16xf32>, vector<2x16x32xf32>, vector<2x16x32xf32> -> vector<2x16x32xf32>
    "tpu.trace_stop"() : () -> ()
    %74 = vector.shape_cast %73 : vector<2x16x32xf32> to vector<32x32xf32>
    %75 = vector.extract_strided_slice %10 {offsets = [64, 0], sizes = [32, 128], strides = [1, 1]} : vector<128x128xf32> to vector<32x128xf32>
    %cst_36 = arith.constant dense<0.000000e+00> : vector<32x128xf32>
    %76 = tpu.matmul %74, %75, %cst_36 {dimension_numbers = #tpu.dot_dimension_numbers<[1], [0], [0], [1], [0, 0, 1, 1], [], []>} : vector<32x32xf32>, vector<32x128xf32>, vector<32x128xf32> -> vector<32x128xf32>
    %77 = arith.addf %55, %76 : vector<32x128xf32>
    %78 = vector.extract_strided_slice %8 {offsets = [0, 0, 96], sizes = [2, 16, 32], strides = [1, 1, 1]} : vector<2x16x128xf32> to vector<2x16x32xf32>
    %79 = vector.extract_strided_slice %7 {offsets = [0, 0, 96], sizes = [2, 16, 32], strides = [1, 1, 1]} : vector<2x16x128xf32> to vector<2x16x32xf32>
    %80 = vector.extract_strided_slice %9 {offsets = [0, 0, 96], sizes = [2, 16, 32], strides = [1, 1, 1]} : vector<2x16x128xf32> to vector<2x16x32xf32>
    "tpu.trace_start"() <{level = 10 : i32, message = "bqd,bkd->bqk"}> : () -> ()
    %cst_37 = arith.constant dense<0.000000e+00> : vector<2x16x16xf32>
    %81 = tpu.matmul %78, %79, %cst_37 {dimension_numbers = #tpu.dot_dimension_numbers<[2], [2], [1], [1], [0, 0, 0, 1, 1, 1], [0], [0]>} : vector<2x16x32xf32>, vector<2x16x32xf32>, vector<2x16x16xf32> -> vector<2x16x16xf32>
    "tpu.trace_stop"() : () -> ()
    %cst_38 = arith.constant dense<0xFF800000> : vector<2x16xf32>
    %82 = vector.multi_reduction <maximumf>, %81, %cst_38 [2] : vector<2x16x16xf32> to vector<2x16xf32>
    %83 = vector.shape_cast %82 : vector<2x16xf32> to vector<2x16x1xf32>
    %84 = vector.broadcast %83 : vector<2x16x1xf32> to vector<2x16x16xf32>
    %85 = arith.subf %81, %84 : vector<2x16x16xf32>
    %86 = math.exp %85 : vector<2x16x16xf32>
    %cst_39 = arith.constant dense<0.000000e+00> : vector<2x16xf32>
    %87 = vector.multi_reduction <add>, %86, %cst_39 [2] : vector<2x16x16xf32> to vector<2x16xf32>
    %88 = vector.shape_cast %87 : vector<2x16xf32> to vector<2x16x1xf32>
    %89 = tpu.reciprocal %88 {approx = true} : vector<2x16x1xf32> -> vector<2x16x1xf32>
    %90 = vector.broadcast %89 : vector<2x16x1xf32> to vector<2x16x16xf32>
    %91 = arith.mulf %86, %90 : vector<2x16x16xf32>
    %c3 = arith.constant 3 : index
    %c0_40 = arith.constant 0 : index
    %c0_41 = arith.constant 0 : index
    %c0_42 = arith.constant 0 : index
    %92 = vector.load %arg7[%c3, %c0_40, %c0_41, %c0_42] : memref<4x2x16x16xf32, #tpu.memory_space<vmem>>, vector<1x2x16x16xf32>
    %93 = vector.shape_cast %92 : vector<1x2x16x16xf32> to vector<2x16x16xf32>
    %94 = vector.shape_cast %91 : vector<2x16x16xf32> to vector<1x2x16x16xf32>
    tpu.vector_store %arg7[%c3, %c0_40, %c0_41, %c0_42], %94 {strides = array<i32>} : memref<4x2x16x16xf32, #tpu.memory_space<vmem>>, vector<1x2x16x16xf32>,
    "tpu.trace_start"() <{level = 10 : i32, message = "bqk,bkd->bqd"}> : () -> ()
    %cst_43 = arith.constant dense<0.000000e+00> : vector<2x16x32xf32>
    %95 = tpu.matmul %91, %80, %cst_43 {dimension_numbers = #tpu.dot_dimension_numbers<[2], [1], [1], [2], [0, 0, 0, 1, 1, 2], [0], [0]>} : vector<2x16x16xf32>, vector<2x16x32xf32>, vector<2x16x32xf32> -> vector<2x16x32xf32>
    "tpu.trace_stop"() : () -> ()
    %96 = vector.shape_cast %95 : vector<2x16x32xf32> to vector<32x32xf32>
    %97 = vector.extract_strided_slice %10 {offsets = [96, 0], sizes = [32, 128], strides = [1, 1]} : vector<128x128xf32> to vector<32x128xf32>
    %cst_44 = arith.constant dense<0.000000e+00> : vector<32x128xf32>
    %98 = tpu.matmul %96, %97, %cst_44 {dimension_numbers = #tpu.dot_dimension_numbers<[1], [0], [0], [1], [0, 0, 1, 1], [], []>} : vector<32x32xf32>, vector<32x128xf32>, vector<32x128xf32> -> vector<32x128xf32>
    %99 = arith.addf %77, %98 : vector<32x128xf32>
    %c0_45 = arith.constant 0 : index
    %c0_46 = arith.constant 0 : index
    %100 = vector.load %arg5[%c0_45, %c0_46] : memref<1x128xf32, #tpu.memory_space<vmem>>, vector<1x128xf32>
    %101 = vector.broadcast %100 : vector<1x128xf32> to vector<32x128xf32>
    %102 = arith.addf %99, %101 : vector<32x128xf32>
    %c0_47 = arith.constant 0 : index
    %c0_48 = arith.constant 0 : index
    %103 = vector.load %arg6[%c0_47, %c0_48] : memref<32x128xf32, #tpu.memory_space<vmem>>, vector<32x128xf32>
    tpu.vector_store %arg6[%c0_47, %c0_48], %102 {strides = array<i32>} : memref<32x128xf32, #tpu.memory_space<vmem>>, vector<32x128xf32>,
    return
  }
}

</mosaic_0001>

<llo_original>
// kernel: pseudo_mhsa_forward.1
$region0: #{pseudo_mhsa_forward.1}
  #allocation0 [shape = 'u32[]', space=smem, size = 0x4, offset = 0x4, fixed_abs, tag = 'smem constant byte address 0x4 - core index']
  #allocation1 [shape = 'u32[144,128]{1,0:T(1,128)}', space=vmem, size = 0x12000, scoped, tag = 'internal scratch']
  %s0 = inlined_call_operand.vmem [shape: f32[32,128], index: 0, kind: input, shape index: {}]
  %s1 = inlined_call_operand.vmem [shape: f32[128,128], index: 1, kind: input, shape index: {}]
  %s2 = inlined_call_operand.vmem [shape: f32[128,128], index: 2, kind: input, shape index: {}]
  %s3 = inlined_call_operand.vmem [shape: f32[128,128], index: 3, kind: input, shape index: {}]
  %s4 = inlined_call_operand.vmem [shape: f32[128,128], index: 4, kind: input, shape index: {}]
  %s5 = inlined_call_operand.vmem [shape: f32[1,128], index: 5, kind: input, shape index: {}]
  %s6 = inlined_call_operand.hbm [shape: f32[32,128], index: 6, kind: output, shape index: {0}]
  %s7 = inlined_call_operand.vmem [shape: f32[4,2,16,16], index: 7, kind: output, shape index: {1}]
  %8 = xla_tuple %s6, %s7
  %s9 = sld [smem:[#allocation0]]
  $region42: #{pseudo_mhsa_forward.1} parent=0
    _
  %s11 = ssub.s32 1, %s9
  %s12 = scalar_select 0, %s11, %s9
  $region1: #{pseudo_mhsa_forward.1} parent=0
    #allocation2 [shape = 'u8[16384]{0}', space=vmem, size = 0x4000, scoped, tag = 'output window, operand 0, single buffered']
    #allocation3 [shape = 's32[1]{0}', space=sflag, size = 0x4, scoped, tag = 'scoped memory for pseudo_mhsa_forward.1']
    %13 = vsyncpa [#allocation3], 0
    // Predicated region
    $region2: #{pseudo_mhsa_forward.1} parent=1 // pred_check
      _
    $region3: #{pseudo_mhsa_forward.1} parent=1 // pred_check_branch
      %15 = sbr.rel (0) target = $region5
    $region4: #{pseudo_mhsa_forward.1} parent=1 // pred_region
      _
    $region5: #{pseudo_mhsa_forward.1} parent=1 // pred_fallthru
      _
    // Predicated region
    $region6: #{pseudo_mhsa_forward.1} parent=1 // pred_check
      _
    $region7: #{pseudo_mhsa_forward.1} parent=1 // pred_check_branch
      %17 = sbr.rel (0) target = $region9
    $region8: #{pseudo_mhsa_forward.1} parent=1 // pred_region
      _
    $region9: #{pseudo_mhsa_forward.1} parent=1 // pred_fallthru
      _
    // Predicated region
    $region10: #{pseudo_mhsa_forward.1} parent=1 // pred_check
      _
    $region11: #{pseudo_mhsa_forward.1} parent=1 // pred_check_branch
      %19 = sbr.rel (0) target = $region13
    $region12: #{pseudo_mhsa_forward.1} parent=1 // pred_region
      _
    $region13: #{pseudo_mhsa_forward.1} parent=1 // pred_fallthru
      _
    // Predicated region
    $region14: #{pseudo_mhsa_forward.1} parent=1 // pred_check
      _
    $region15: #{pseudo_mhsa_forward.1} parent=1 // pred_check_branch
      %21 = sbr.rel (0) target = $region17
    $region16: #{pseudo_mhsa_forward.1} parent=1 // pred_region
      _
    $region17: #{pseudo_mhsa_forward.1} parent=1 // pred_fallthru
      _
    // Predicated region
    $region18: #{pseudo_mhsa_forward.1} parent=1 // pred_check
      _
    $region19: #{pseudo_mhsa_forward.1} parent=1 // pred_check_branch
      %23 = sbr.rel (0) target = $region21
    $region20: #{pseudo_mhsa_forward.1} parent=1 // pred_region
      _
    $region21: #{pseudo_mhsa_forward.1} parent=1 // pred_fallthru
      _
    // Predicated region
    $region22: #{pseudo_mhsa_forward.1} parent=1 // pred_check
      _
    $region23: #{pseudo_mhsa_forward.1} parent=1 // pred_check_branch
      %25 = sbr.rel (0) target = $region25
    $region24: #{pseudo_mhsa_forward.1} parent=1 // pred_region
      _
    $region25: #{pseudo_mhsa_forward.1} parent=1 // pred_fallthru
      _
    %v26 = vld [vmem:[%s0] sm:$0xff]
    %v27 = vld [vmem:[%s0 + $0x8] sm:$0xff]
    %v28 = vld [vmem:[%s0 + $0x10] sm:$0xff]
    %v29 = vld [vmem:[%s0 + $0x18] sm:$0xff]
    %v30 = vld [vmem:[%s1] sm:$0xff]
    %v31 = vld [vmem:[%s1 + $0x8] sm:$0xff]
    %v32 = vld [vmem:[%s1 + $0x10] sm:$0xff]
    %v33 = vld [vmem:[%s1 + $0x18] sm:$0xff]
    %v34 = vld [vmem:[%s1 + $0x20] sm:$0xff]
    %v35 = vld [vmem:[%s1 + $0x28] sm:$0xff]
    %v36 = vld [vmem:[%s1 + $0x30] sm:$0xff]
    %v37 = vld [vmem:[%s1 + $0x38] sm:$0xff]
    %v38 = vld [vmem:[%s1 + $0x40] sm:$0xff]
    %v39 = vld [vmem:[%s1 + $0x48] sm:$0xff]
    %v40 = vld [vmem:[%s1 + $0x50] sm:$0xff]
    %v41 = vld [vmem:[%s1 + $0x58] sm:$0xff]
    %v42 = vld [vmem:[%s1 + $0x60] sm:$0xff]
    %v43 = vld [vmem:[%s1 + $0x68] sm:$0xff]
    %v44 = vld [vmem:[%s1 + $0x70] sm:$0xff]
    %v45 = vld [vmem:[%s1 + $0x78] sm:$0xff]
    %46 = vmatprep.subr.mxu0 0.0
    %47 = vmatpush1.msra.mxu0 %v30
    %48 = vmatprep.subr.mxu0 0.0
    %49 = vmatpush1.msra.mxu0 %v31
    %50 = vmatprep.subr.mxu0 0.0
    %51 = vmatpush1.msra.mxu0 %v32
    %52 = vmatprep.subr.mxu0 0.0
    %53 = vmatpush1.msra.mxu0 %v33
    %54 = vmatprep.subr.mxu0 0.0
    %55 = vmatpush1.msra.mxu0 %v34
    %56 = vmatprep.subr.mxu0 0.0
    %57 = vmatpush1.msra.mxu0 %v35
    %58 = vmatprep.subr.mxu0 0.0
    %59 = vmatpush1.msra.mxu0 %v36
    %60 = vmatprep.subr.mxu0 0.0
    %61 = vmatpush1.msra.mxu0 %v37
    %62 = vmatprep.subr.mxu0 0.0
    %63 = vmatpush1.msra.mxu0 %v38
    %64 = vmatprep.subr.mxu0 0.0
    %65 = vmatpush1.msra.mxu0 %v39
    %66 = vmatprep.subr.mxu0 0.0
    %67 = vmatpush1.msra.mxu0 %v40
    %68 = vmatprep.subr.mxu0 0.0
    %69 = vmatpush1.msra.mxu0 %v41
    %70 = vmatprep.subr.mxu0 0.0
    %71 = vmatpush1.msra.mxu0 %v42
    %72 = vmatprep.subr.mxu0 0.0
    %73 = vmatpush1.msra.mxu0 %v43
    %74 = vmatprep.subr.mxu0 0.0
    %75 = vmatpush1.msra.mxu0 %v44
    %76 = vmatprep.subr.mxu0 0.0
    %77 = vmatpush1.msra.mxu0 %v45
    %78 = vmatprep.subr.mxu0 0.0
    %79 = vmatpush1.msra.mxu0 0.0
    %80 = vmatprep.subr.mxu0 0.0
    %81 = vmatpush1.msra.mxu0 0.0
    %82 = vmatprep.subr.mxu0 0.0
    %83 = vmatpush1.msra.mxu0 0.0
    %84 = vmatprep.subr.mxu0 0.0
    %85 = vmatpush1.msra.mxu0 0.0
    %86 = vmatprep.subr.mxu0 0.0
    %87 = vmatpush1.msra.mxu0 0.0
    %88 = vmatprep.subr.mxu0 0.0
    %89 = vmatpush1.msra.mxu0 0.0
    %90 = vmatprep.subr.mxu0 0.0
    %91 = vmatpush1.msra.mxu0 0.0
    %92 = vmatprep.subr.mxu0 0.0
    %93 = vmatpush1.msra.mxu0 0.0
    %94 = vmatprep.subr.mxu0 0.0
    %95 = vmatpush1.msra.mxu0 0.0
    %96 = vmatprep.subr.mxu0 0.0
    %97 = vmatpush1.msra.mxu0 0.0
    %98 = vmatprep.subr.mxu0 0.0
    %99 = vmatpush1.msra.mxu0 0.0
    %100 = vmatprep.subr.mxu0 0.0
    %101 = vmatpush1.msra.mxu0 0.0
    %102 = vmatprep.subr.mxu0 0.0
    %103 = vmatpush1.msra.mxu0 0.0
    %104 = vmatprep.subr.mxu0 0.0
    %105 = vmatpush1.msra.mxu0 0.0
    %106 = vmatprep.subr.mxu0 0.0
    %107 = vmatpush1.msra.mxu0 0.0
    %108 = vmatprep.subr.mxu0 0.0
    %109 = vmatpush1.msra.mxu0 0.0
    %110 = vmatprep.mubr.f32.mxu0 0.0
    %111 = vmatmul.mubr.f32.gmra.mrb[0].mxu0 %v26
    %v112 = vpop.f32.mrb[0].mxu0
    %v113 = vadd.f32 0.0, %v112
    %v114 = vpop.f32.mrb[0].mxu0
    %115 = vmatprep.mubr.f32.mxu0 0.0
    %116 = vmatmul.mubr.f32.gmra.mrb[0].mxu0 %v27
    %v117 = vpop.f32.mrb[0].mxu0
    %v118 = vadd.f32 0.0, %v117
    %v119 = vpop.f32.mrb[0].mxu0
    %120 = vmatprep.mubr.f32.mxu0 0.0
    %121 = vmatmul.mubr.f32.gmra.mrb[0].mxu0 %v28
    %v122 = vpop.f32.mrb[0].mxu0
    %v123 = vadd.f32 0.0, %v122
    %v124 = vpop.f32.mrb[0].mxu0
    %125 = vmatprep.mubr.f32.mxu0 0.0
    %126 = vmatmul.mubr.f32.gmra.mrb[0].mxu0 %v29
    %v127 = vpop.f32.mrb[0].mxu0
    %v128 = vadd.f32 0.0, %v127
    %v129 = vpop.f32.mrb[0].mxu0
    %130 = vdwg.mxu0
    %v131 = vld [vmem:[%s2] sm:$0xff]
    %v132 = vld [vmem:[%s2 + $0x8] sm:$0xff]
    %v133 = vld [vmem:[%s2 + $0x10] sm:$0xff]
    %v134 = vld [vmem:[%s2 + $0x18] sm:$0xff]
    %v135 = vld [vmem:[%s2 + $0x20] sm:$0xff]
    %v136 = vld [vmem:[%s2 + $0x28] sm:$0xff]
    %v137 = vld [vmem:[%s2 + $0x30] sm:$0xff]
    %v138 = vld [vmem:[%s2 + $0x38] sm:$0xff]
    %v139 = vld [vmem:[%s2 + $0x40] sm:$0xff]
    %v140 = vld [vmem:[%s2 + $0x48] sm:$0xff]
    %v141 = vld [vmem:[%s2 + $0x50] sm:$0xff]
    %v142 = vld [vmem:[%s2 + $0x58] sm:$0xff]
    %v143 = vld [vmem:[%s2 + $0x60] sm:$0xff]
    %v144 = vld [vmem:[%s2 + $0x68] sm:$0xff]
    %v145 = vld [vmem:[%s2 + $0x70] sm:$0xff]
    %v146 = vld [vmem:[%s2 + $0x78] sm:$0xff]
    %147 = vmatprep.subr.mxu0 0.0
    %148 = vmatpush1.msra.mxu0 %v131
    %149 = vmatprep.subr.mxu0 0.0
    %150 = vmatpush1.msra.mxu0 %v132
    %151 = vmatprep.subr.mxu0 0.0
    %152 = vmatpush1.msra.mxu0 %v133
    %153 = vmatprep.subr.mxu0 0.0
    %154 = vmatpush1.msra.mxu0 %v134
    %155 = vmatprep.subr.mxu0 0.0
    %156 = vmatpush1.msra.mxu0 %v135
    %157 = vmatprep.subr.mxu0 0.0
    %158 = vmatpush1.msra.mxu0 %v136
    %159 = vmatprep.subr.mxu0 0.0
    %160 = vmatpush1.msra.mxu0 %v137
    %161 = vmatprep.subr.mxu0 0.0
    %162 = vmatpush1.msra.mxu0 %v138
    %163 = vmatprep.subr.mxu0 0.0
    %164 = vmatpush1.msra.mxu0 %v139
    %165 = vmatprep.subr.mxu0 0.0
    %166 = vmatpush1.msra.mxu0 %v140
    %167 = vmatprep.subr.mxu0 0.0
    %168 = vmatpush1.msra.mxu0 %v141
    %169 = vmatprep.subr.mxu0 0.0
    %170 = vmatpush1.msra.mxu0 %v142
    %171 = vmatprep.subr.mxu0 0.0
    %172 = vmatpush1.msra.mxu0 %v143
    %173 = vmatprep.subr.mxu0 0.0
    %174 = vmatpush1.msra.mxu0 %v144
    %175 = vmatprep.subr.mxu0 0.0
    %176 = vmatpush1.msra.mxu0 %v145
    %177 = vmatprep.subr.mxu0 0.0
    %178 = vmatpush1.msra.mxu0 %v146
    %179 = vmatprep.subr.mxu0 0.0
    %180 = vmatpush1.msra.mxu0 0.0
    %181 = vmatprep.subr.mxu0 0.0
    %182 = vmatpush1.msra.mxu0 0.0
    %183 = vmatprep.subr.mxu0 0.0
    %184 = vmatpush1.msra.mxu0 0.0
    %185 = vmatprep.subr.mxu0 0.0
    %186 = vmatpush1.msra.mxu0 0.0
    %187 = vmatprep.subr.mxu0 0.0
    %188 = vmatpush1.msra.mxu0 0.0
    %189 = vmatprep.subr.mxu0 0.0
    %190 = vmatpush1.msra.mxu0 0.0
    %191 = vmatprep.subr.mxu0 0.0
    %192 = vmatpush1.msra.mxu0 0.0
    %193 = vmatprep.subr.mxu0 0.0
    %194 = vmatpush1.msra.mxu0 0.0
    %195 = vmatprep.subr.mxu0 0.0
    %196 = vmatpush1.msra.mxu0 0.0
    %197 = vmatprep.subr.mxu0 0.0
    %198 = vmatpush1.msra.mxu0 0.0
    %199 = vmatprep.subr.mxu0 0.0
    %200 = vmatpush1.msra.mxu0 0.0
    %201 = vmatprep.subr.mxu0 0.0
    %202 = vmatpush1.msra.mxu0 0.0
    %203 = vmatprep.subr.mxu0 0.0
    %204 = vmatpush1.msra.mxu0 0.0
    %205 = vmatprep.subr.mxu0 0.0
    %206 = vmatpush1.msra.mxu0 0.0
    %207 = vmatprep.subr.mxu0 0.0
    %208 = vmatpush1.msra.mxu0 0.0
    %209 = vmatprep.subr.mxu0 0.0
    %210 = vmatpush1.msra.mxu0 0.0
    %211 = vmatprep.mubr.f32.mxu0 0.0
    %212 = vmatmul.mubr.f32.gmra.mrb[0].mxu0 %v113
    %v213 = vpop.f32.mrb[0].mxu0
    %v214 = vadd.f32 0.0, %v213
    %v215 = vpop.f32.mrb[0].mxu0
    %216 = vmatprep.mubr.f32.mxu0 0.0
    %217 = vmatmul.mubr.f32.gmra.mrb[0].mxu0 %v118
    %v218 = vpop.f32.mrb[0].mxu0
    %v219 = vadd.f32 0.0, %v218
    %v220 = vpop.f32.mrb[0].mxu0
    %221 = vmatprep.mubr.f32.mxu0 0.0
    %222 = vmatmul.mubr.f32.gmra.mrb[0].mxu0 %v123
    %v223 = vpop.f32.mrb[0].mxu0
    %v224 = vadd.f32 0.0, %v223
    %v225 = vpop.f32.mrb[0].mxu0
    %226 = vmatprep.mubr.f32.mxu0 0.0
    %227 = vmatmul.mubr.f32.gmra.mrb[0].mxu0 %v128
    %v228 = vpop.f32.mrb[0].mxu0
    %v229 = vadd.f32 0.0, %v228
    %v230 = vpop.f32.mrb[0].mxu0
    %231 = vdwg.mxu0
    %v232 = vld [vmem:[%s3] sm:$0xff]
    %v233 = vld [vmem:[%s3 + $0x8] sm:$0xff]
    %v234 = vld [vmem:[%s3 + $0x10] sm:$0xff]
    %v235 = vld [vmem:[%s3 + $0x18] sm:$0xff]
    %v236 = vld [vmem:[%s3 + $0x20] sm:$0xff]
    %v237 = vld [vmem:[%s3 + $0x28] sm:$0xff]
    %v238 = vld [vmem:[%s3 + $0x30] sm:$0xff]
    %v239 = vld [vmem:[%s3 + $0x38] sm:$0xff]
    %v240 = vld [vmem:[%s3 + $0x40] sm:$0xff]
    %v241 = vld [vmem:[%s3 + $0x48] sm:$0xff]
    %v242 = vld [vmem:[%s3 + $0x50] sm:$0xff]
    %v243 = vld [vmem:[%s3 + $0x58] sm:$0xff]
    %v244 = vld [vmem:[%s3 + $0x60] sm:$0xff]
    %v245 = vld [vmem:[%s3 + $0x68] sm:$0xff]
    %v246 = vld [vmem:[%s3 + $0x70] sm:$0xff]
    %v247 = vld [vmem:[%s3 + $0x78] sm:$0xff]
    %248 = vmatprep.subr.mxu0 0.0
    %249 = vmatpush1.msra.mxu0 %v232
    %250 = vmatprep.subr.mxu0 0.0
    %251 = vmatpush1.msra.mxu0 %v233
    %252 = vmatprep.subr.mxu0 0.0
    %253 = vmatpush1.msra.mxu0 %v234
    %254 = vmatprep.subr.mxu0 0.0
    %255 = vmatpush1.msra.mxu0 %v235
    %256 = vmatprep.subr.mxu0 0.0
    %257 = vmatpush1.msra.mxu0 %v236
    %258 = vmatprep.subr.mxu0 0.0
    %259 = vmatpush1.msra.mxu0 %v237
    %260 = vmatprep.subr.mxu0 0.0
    %261 = vmatpush1.msra.mxu0 %v238
    %262 = vmatprep.subr.mxu0 0.0
    %263 = vmatpush1.msra.mxu0 %v239
    %264 = vmatprep.subr.mxu0 0.0
    %265 = vmatpush1.msra.mxu0 %v240
    %266 = vmatprep.subr.mxu0 0.0
    %267 = vmatpush1.msra.mxu0 %v241
    %268 = vmatprep.subr.mxu0 0.0
    %269 = vmatpush1.msra.mxu0 %v242
    %270 = vmatprep.subr.mxu0 0.0
    %271 = vmatpush1.msra.mxu0 %v243
    %272 = vmatprep.subr.mxu0 0.0
    %273 = vmatpush1.msra.mxu0 %v244
    %274 = vmatprep.subr.mxu0 0.0
    %275 = vmatpush1.msra.mxu0 %v245
    %276 = vmatprep.subr.mxu0 0.0
    %277 = vmatpush1.msra.mxu0 %v246
    %278 = vmatprep.subr.mxu0 0.0
    %279 = vmatpush1.msra.mxu0 %v247
    %280 = vmatprep.subr.mxu0 0.0
    %281 = vmatpush1.msra.mxu0 0.0
    %282 = vmatprep.subr.mxu0 0.0
    %283 = vmatpush1.msra.mxu0 0.0
    %284 = vmatprep.subr.mxu0 0.0
    %285 = vmatpush1.msra.mxu0 0.0
    %286 = vmatprep.subr.mxu0 0.0
    %287 = vmatpush1.msra.mxu0 0.0
    %288 = vmatprep.subr.mxu0 0.0
    %289 = vmatpush1.msra.mxu0 0.0
    %290 = vmatprep.subr.mxu0 0.0
    %291 = vmatpush1.msra.mxu0 0.0
    %292 = vmatprep.subr.mxu0 0.0
    %293 = vmatpush1.msra.mxu0 0.0
    %294 = vmatprep.subr.mxu0 0.0
    %295 = vmatpush1.msra.mxu0 0.0
    %296 = vmatprep.subr.mxu0 0.0
    %297 = vmatpush1.msra.mxu0 0.0
    %298 = vmatprep.subr.mxu0 0.0
    %299 = vmatpush1.msra.mxu0 0.0
    %300 = vmatprep.subr.mxu0 0.0
    %301 = vmatpush1.msra.mxu0 0.0
    %302 = vmatprep.subr.mxu0 0.0
    %303 = vmatpush1.msra.mxu0 0.0
    %304 = vmatprep.subr.mxu0 0.0
    %305 = vmatpush1.msra.mxu0 0.0
    %306 = vmatprep.subr.mxu0 0.0
    %307 = vmatpush1.msra.mxu0 0.0
    %308 = vmatprep.subr.mxu0 0.0
    %309 = vmatpush1.msra.mxu0 0.0
    %310 = vmatprep.subr.mxu0 0.0
    %311 = vmatpush1.msra.mxu0 0.0
    %312 = vmatprep.mubr.f32.mxu0 0.0
    %313 = vmatmul.mubr.f32.gmra.mrb[0].mxu0 %v113
    %v314 = vpop.f32.mrb[0].mxu0
    %v315 = vadd.f32 0.0, %v314
    %v316 = vpop.f32.mrb[0].mxu0
    %317 = vmatprep.mubr.f32.mxu0 0.0
    %318 = vmatmul.mubr.f32.gmra.mrb[0].mxu0 %v118
    %v319 = vpop.f32.mrb[0].mxu0
    %v320 = vadd.f32 0.0, %v319
    %v321 = vpop.f32.mrb[0].mxu0
    %322 = vmatprep.mubr.f32.mxu0 0.0
    %323 = vmatmul.mubr.f32.gmra.mrb[0].mxu0 %v123
    %v324 = vpop.f32.mrb[0].mxu0
    %v325 = vadd.f32 0.0, %v324
    %v326 = vpop.f32.mrb[0].mxu0
    %327 = vmatprep.mubr.f32.mxu0 0.0
    %328 = vmatmul.mubr.f32.gmra.mrb[0].mxu0 %v128
    %v329 = vpop.f32.mrb[0].mxu0
    %v330 = vadd.f32 0.0, %v329
    %v331 = vpop.f32.mrb[0].mxu0
    %332 = vdwg.mxu0
    %v333 = vld [vmem:[%s4] sm:$0xff]
    %v334 = vld [vmem:[%s4 + $0x8] sm:$0xff]
    %v335 = vld [vmem:[%s4 + $0x10] sm:$0xff]
    %v336 = vld [vmem:[%s4 + $0x18] sm:$0xff]
    %v337 = vld [vmem:[%s4 + $0x20] sm:$0xff]
    %v338 = vld [vmem:[%s4 + $0x28] sm:$0xff]
    %v339 = vld [vmem:[%s4 + $0x30] sm:$0xff]
    %v340 = vld [vmem:[%s4 + $0x38] sm:$0xff]
    %v341 = vld [vmem:[%s4 + $0x40] sm:$0xff]
    %v342 = vld [vmem:[%s4 + $0x48] sm:$0xff]
    %v343 = vld [vmem:[%s4 + $0x50] sm:$0xff]
    %v344 = vld [vmem:[%s4 + $0x58] sm:$0xff]
    %v345 = vld [vmem:[%s4 + $0x60] sm:$0xff]
    %v346 = vld [vmem:[%s4 + $0x68] sm:$0xff]
    %v347 = vld [vmem:[%s4 + $0x70] sm:$0xff]
    %v348 = vld [vmem:[%s4 + $0x78] sm:$0xff]
    %vm349 = vcmask 261120
    %v351 = vsel %vm349, %v214, 0
    %v354 = vsel %vm349, %v219, 0
    %v357 = vsel %vm349, %v113, 0
    %v360 = vsel %vm349, %v118, 0
    %362 = vmatprep.subr.mxu0 0.0
    %363 = vmatpush1.xpose.msra.mxu0 %v357
    %364 = vmatprep.subr.mxu0 0.0
    %365 = vmatpush1.xpose.msra.mxu0 %v360
    %366 = vmatprep.subr.mxu0 0.0
    %367 = vmatpush1.xpose.msra.mxu0 0.0
    %368 = vmatprep.subr.mxu0 0.0
    %369 = vmatpush1.xpose.msra.mxu0 0.0
    %370 = vmatprep.subr.mxu0 0.0
    %371 = vmatpush1.xpose.msra.mxu0 0.0
    %372 = vmatprep.subr.mxu0 0.0
    %373 = vmatpush1.xpose.msra.mxu0 0.0
    %374 = vmatprep.subr.mxu0 0.0
    %375 = vmatpush1.xpose.msra.mxu0 0.0
    %376 = vmatprep.subr.mxu0 0.0
    %377 = vmatpush1.xpose.msra.mxu0 0.0
    %378 = vmatprep.subr.mxu0 0.0
    %379 = vmatpush1.xpose.msra.mxu0 0.0
    %380 = vmatprep.subr.mxu0 0.0
    %381 = vmatpush1.xpose.msra.mxu0 0.0
    %382 = vmatprep.subr.mxu0 0.0
    %383 = vmatpush1.xpose.msra.mxu0 0.0
    %384 = vmatprep.subr.mxu0 0.0
    %385 = vmatpush1.xpose.msra.mxu0 0.0
    %386 = vmatprep.subr.mxu0 0.0
    %387 = vmatpush1.xpose.msra.mxu0 0.0
    %388 = vmatprep.subr.mxu0 0.0
    %389 = vmatpush1.xpose.msra.mxu0 0.0
    %390 = vmatprep.subr.mxu0 0.0
    %391 = vmatpush1.xpose.msra.mxu0 0.0
    %392 = vmatprep.subr.mxu0 0.0
    %393 = vmatpush1.xpose.msra.mxu0 0.0
    %394 = vmatprep.subr.mxu0 0.0
    %395 = vmatpush1.xpose.msra.mxu0 0.0
    %396 = vmatprep.subr.mxu0 0.0
    %397 = vmatpush1.xpose.msra.mxu0 0.0
    %398 = vmatprep.subr.mxu0 0.0
    %399 = vmatpush1.xpose.msra.mxu0 0.0
    %400 = vmatprep.subr.mxu0 0.0
    %401 = vmatpush1.xpose.msra.mxu0 0.0
    %402 = vmatprep.subr.mxu0 0.0
    %403 = vmatpush1.xpose.msra.mxu0 0.0
    %404 = vmatprep.subr.mxu0 0.0
    %405 = vmatpush1.xpose.msra.mxu0 0.0
    %406 = vmatprep.subr.mxu0 0.0
    %407 = vmatpush1.xpose.msra.mxu0 0.0
    %408 = vmatprep.subr.mxu0 0.0
    %409 = vmatpush1.xpose.msra.mxu0 0.0
    %410 = vmatprep.subr.mxu0 0.0
    %411 = vmatpush1.xpose.msra.mxu0 0.0
    %412 = vmatprep.subr.mxu0 0.0
    %413 = vmatpush1.xpose.msra.mxu0 0.0
    %414 = vmatprep.subr.mxu0 0.0
    %415 = vmatpush1.xpose.msra.mxu0 0.0
    %416 = vmatprep.subr.mxu0 0.0
    %417 = vmatpush1.xpose.msra.mxu0 0.0
    %418 = vmatprep.subr.mxu0 0.0
    %419 = vmatpush1.xpose.msra.mxu0 0.0
    %420 = vmatprep.subr.mxu0 0.0
    %421 = vmatpush1.xpose.msra.mxu0 0.0
    %422 = vmatprep.subr.mxu0 0.0
    %423 = vmatpush1.xpose.msra.mxu0 0.0
    %424 = vmatprep.subr.mxu0 0.0
    %425 = vmatpush1.xpose.msra.mxu0 0.0
    %426 = vmatprep.mubr.f32.mxu0 0.0
    %427 = vmatmul.mubr.f32.gmra.mrb[0].mxu0 %v351
    %v428 = vpop.f32.mrb[0].mxu0
    %v429 = vadd.f32 0.0, %v428
    %v430 = vpop.f32.mrb[0].mxu0
    %431 = vmatprep.mubr.f32.mxu0 0.0
    %432 = vmatmul.mubr.f32.gmra.mrb[0].mxu0 %v354
    %v433 = vpop.f32.mrb[0].mxu0
    %v434 = vadd.f32 0.0, %v433
    %v435 = vpop.f32.mrb[0].mxu0
    %436 = vdwg.mxu0
    %v438 = vsel %vm349, %v224, 0
    %v441 = vsel %vm349, %v229, 0
    %v444 = vsel %vm349, %v123, 0
    %v447 = vsel %vm349, %v128, 0
    %449 = vmatprep.subr.mxu0 0.0
    %450 = vmatpush1.xpose.msra.mxu0 %v444
    %451 = vmatprep.subr.mxu0 0.0
    %452 = vmatpush1.xpose.msra.mxu0 %v447
    %453 = vmatprep.subr.mxu0 0.0
    %454 = vmatpush1.xpose.msra.mxu0 0.0
    %455 = vmatprep.subr.mxu0 0.0
    %456 = vmatpush1.xpose.msra.mxu0 0.0
    %457 = vmatprep.subr.mxu0 0.0
    %458 = vmatpush1.xpose.msra.mxu0 0.0
    %459 = vmatprep.subr.mxu0 0.0
    %460 = vmatpush1.xpose.msra.mxu0 0.0
    %461 = vmatprep.subr.mxu0 0.0
    %462 = vmatpush1.xpose.msra.mxu0 0.0
    %463 = vmatprep.subr.mxu0 0.0
    %464 = vmatpush1.xpose.msra.mxu0 0.0
    %465 = vmatprep.subr.mxu0 0.0
    %466 = vmatpush1.xpose.msra.mxu0 0.0
    %467 = vmatprep.subr.mxu0 0.0
    %468 = vmatpush1.xpose.msra.mxu0 0.0
    %469 = vmatprep.subr.mxu0 0.0
    %470 = vmatpush1.xpose.msra.mxu0 0.0
    %471 = vmatprep.subr.mxu0 0.0
    %472 = vmatpush1.xpose.msra.mxu0 0.0
    %473 = vmatprep.subr.mxu0 0.0
    %474 = vmatpush1.xpose.msra.mxu0 0.0
    %475 = vmatprep.subr.mxu0 0.0
    %476 = vmatpush1.xpose.msra.mxu0 0.0
    %477 = vmatprep.subr.mxu0 0.0
    %478 = vmatpush1.xpose.msra.mxu0 0.0
    %479 = vmatprep.subr.mxu0 0.0
    %480 = vmatpush1.xpose.msra.mxu0 0.0
    %481 = vmatprep.subr.mxu0 0.0
    %482 = vmatpush1.xpose.msra.mxu0 0.0
    %483 = vmatprep.subr.mxu0 0.0
    %484 = vmatpush1.xpose.msra.mxu0 0.0
    %485 = vmatprep.subr.mxu0 0.0
    %486 = vmatpush1.xpose.msra.mxu0 0.0
    %487 = vmatprep.subr.mxu0 0.0
    %488 = vmatpush1.xpose.msra.mxu0 0.0
    %489 = vmatprep.subr.mxu0 0.0
    %490 = vmatpush1.xpose.msra.mxu0 0.0
    %491 = vmatprep.subr.mxu0 0.0
    %492 = vmatpush1.xpose.msra.mxu0 0.0
    %493 = vmatprep.subr.mxu0 0.0
    %494 = vmatpush1.xpose.msra.mxu0 0.0
    %495 = vmatprep.subr.mxu0 0.0
    %496 = vmatpush1.xpose.msra.mxu0 0.0
    %497 = vmatprep.subr.mxu0 0.0
    %498 = vmatpush1.xpose.msra.mxu0 0.0
    %499 = vmatprep.subr.mxu0 0.0
    %500 = vmatpush1.xpose.msra.mxu0 0.0
    %501 = vmatprep.subr.mxu0 0.0
    %502 = vmatpush1.xpose.msra.mxu0 0.0
    %503 = vmatprep.subr.mxu0 0.0
    %504 = vmatpush1.xpose.msra.mxu0 0.0
    %505 = vmatprep.subr.mxu0 0.0
    %506 = vmatpush1.xpose.msra.mxu0 0.0
    %507 = vmatprep.subr.mxu0 0.0
    %508 = vmatpush1.xpose.msra.mxu0 0.0
    %509 = vmatprep.subr.mxu0 0.0
    %510 = vmatpush1.xpose.msra.mxu0 0.0
    %511 = vmatprep.subr.mxu0 0.0
    %512 = vmatpush1.xpose.msra.mxu0 0.0
    %513 = vmatprep.mubr.f32.mxu0 0.0
    %514 = vmatmul.mubr.f32.gmra.mrb[0].mxu0 %v438
    %v515 = vpop.f32.mrb[0].mxu0
    %v516 = vadd.f32 0.0, %v515
    %v517 = vpop.f32.mrb[0].mxu0
    %518 = vmatprep.mubr.f32.mxu0 0.0
    %519 = vmatmul.mubr.f32.gmra.mrb[0].mxu0 %v441
    %v520 = vpop.f32.mrb[0].mxu0
    %v521 = vadd.f32 0.0, %v520
    %v522 = vpop.f32.mrb[0].mxu0
    %523 = vdwg.mxu0
    %vm524 = vcmask 130048
    %v525 = vsel %vm524, %v429, -inf
    %526 = vmax.xlane.f32.xlu0 %v525
    %v527 = vpop.xlane.xlu0 %526
    %v528 = vsel %vm524, %v434, -inf
    %529 = vmax.xlane.f32.xlu0 %v528
    %v530 = vpop.xlane.xlu0 %529
    %v531 = vsel %vm524, %v516, -inf
    %532 = vmax.xlane.f32.xlu0 %v531
    %v533 = vpop.xlane.xlu0 %532
    %v534 = vsel %vm524, %v521, -inf
    %535 = vmax.xlane.f32.xlu0 %v534
    %v536 = vpop.xlane.xlu0 %535
    %v537 = vsub.f32 %v429, %v527
    %v538 = vsub.f32 %v434, %v530
    %v539 = vsub.f32 %v516, %v533
    %v540 = vsub.f32 %v521, %v536
    %v541 = vmul.f32 %v537, 1.442695
    %v542 = vpow.pop %v541
    %v543 = vmul.f32 %v538, 1.442695
    %v544 = vpow.pop %v543
    %v545 = vmul.f32 %v539, 1.442695
    %v546 = vpow.pop %v545
    %v547 = vmul.f32 %v540, 1.442695
    %v548 = vpow.pop %v547
    %v549 = vsel %vm524, %v542, 0.0
    %550 = vadd.xlane.f32.xlu0 %v549
    %v551 = vpop.xlane.xlu0 %550
    %v552 = vsel %vm524, %v544, 0.0
    %553 = vadd.xlane.f32.xlu0 %v552
    %v554 = vpop.xlane.xlu0 %553
    %v555 = vsel %vm524, %v546, 0.0
    %556 = vadd.xlane.f32.xlu0 %v555
    %v557 = vpop.xlane.xlu0 %556
    %v558 = vsel %vm524, %v548, 0.0
    %559 = vadd.xlane.f32.xlu0 %v558
    %v560 = vpop.xlane.xlu0 %559
    %v561 = vrcp.pop %v551
    %v562 = vrcp.pop %v554
    %v563 = vrcp.pop %v557
    %v564 = vrcp.pop %v560
    %v565 = vmul.f32 %v542, %v561
    %v566 = vmul.f32 %v544, %v562
    %v567 = vmul.f32 %v546, %v563
    %v568 = vmul.f32 %v548, %v564
    %569 = vst.msk [vmem:[%s7] sm:$0xff] %vm524, %v565
    %570 = vst.msk [vmem:[%s7 + $0x8] sm:$0xff] %vm524, %v566
    %571 = vst.msk [vmem:[%s7 + $0x10] sm:$0xff] %vm524, %v567
    %572 = vst.msk [vmem:[%s7 + $0x18] sm:$0xff] %vm524, %v568
    %v574 = vsel %vm524, %v565, 0
    %v577 = vsel %vm524, %v566, 0
    %579 = vmatprep.subr.mxu0 0.0
    %580 = vmatpush1.msra.mxu0 %v315
    %581 = vmatprep.subr.mxu0 0.0
    %582 = vmatpush1.msra.mxu0 %v320
    %583 = vmatprep.subr.mxu0 0.0
    %584 = vmatpush1.msra.mxu0 0.0
    %585 = vmatprep.subr.mxu0 0.0
    %586 = vmatpush1.msra.mxu0 0.0
    %587 = vmatprep.subr.mxu0 0.0
    %588 = vmatpush1.msra.mxu0 0.0
    %589 = vmatprep.subr.mxu0 0.0
    %590 = vmatpush1.msra.mxu0 0.0
    %591 = vmatprep.subr.mxu0 0.0
    %592 = vmatpush1.msra.mxu0 0.0
    %593 = vmatprep.subr.mxu0 0.0
    %594 = vmatpush1.msra.mxu0 0.0
    %595 = vmatprep.subr.mxu0 0.0
    %596 = vmatpush1.msra.mxu0 0.0
    %597 = vmatprep.subr.mxu0 0.0
    %598 = vmatpush1.msra.mxu0 0.0
    %599 = vmatprep.subr.mxu0 0.0
    %600 = vmatpush1.msra.mxu0 0.0
    %601 = vmatprep.subr.mxu0 0.0
    %602 = vmatpush1.msra.mxu0 0.0
    %603 = vmatprep.subr.mxu0 0.0
    %604 = vmatpush1.msra.mxu0 0.0
    %605 = vmatprep.subr.mxu0 0.0
    %606 = vmatpush1.msra.mxu0 0.0
    %607 = vmatprep.subr.mxu0 0.0
    %608 = vmatpush1.msra.mxu0 0.0
    %609 = vmatprep.subr.mxu0 0.0
    %610 = vmatpush1.msra.mxu0 0.0
    %611 = vmatprep.subr.mxu0 0.0
    %612 = vmatpush1.msra.mxu0 0.0
    %613 = vmatprep.subr.mxu0 0.0
    %614 = vmatpush1.msra.mxu0 0.0
    %615 = vmatprep.subr.mxu0 0.0
    %616 = vmatpush1.msra.mxu0 0.0
    %617 = vmatprep.subr.mxu0 0.0
    %618 = vmatpush1.msra.mxu0 0.0
    %619 = vmatprep.subr.mxu0 0.0
    %620 = vmatpush1.msra.mxu0 0.0
    %621 = vmatprep.subr.mxu0 0.0
    %622 = vmatpush1.msra.mxu0 0.0
    %623 = vmatprep.subr.mxu0 0.0
    %624 = vmatpush1.msra.mxu0 0.0
    %625 = vmatprep.subr.mxu0 0.0
    %626 = vmatpush1.msra.mxu0 0.0
    %627 = vmatprep.subr.mxu0 0.0
    %628 = vmatpush1.msra.mxu0 0.0
    %629 = vmatprep.subr.mxu0 0.0
    %630 = vmatpush1.msra.mxu0 0.0
    %631 = vmatprep.subr.mxu0 0.0
    %632 = vmatpush1.msra.mxu0 0.0
    %633 = vmatprep.subr.mxu0 0.0
    %634 = vmatpush1.msra.mxu0 0.0
    %635 = vmatprep.subr.mxu0 0.0
    %636 = vmatpush1.msra.mxu0 0.0
    %637 = vmatprep.subr.mxu0 0.0
    %638 = vmatpush1.msra.mxu0 0.0
    %639 = vmatprep.subr.mxu0 0.0
    %640 = vmatpush1.msra.mxu0 0.0
    %641 = vmatprep.subr.mxu0 0.0
    %642 = vmatpush1.msra.mxu0 0.0
    %643 = vmatprep.mubr.f32.mxu0 0.0
    %644 = vmatmul.mubr.f32.gmra.mrb[0].mxu0 %v574
    %v645 = vpop.f32.mrb[0].mxu0
    %v646 = vadd.f32 0.0, %v645
    %v647 = vpop.f32.mrb[0].mxu0
    %648 = vmatprep.mubr.f32.mxu0 0.0
    %649 = vmatmul.mubr.f32.gmra.mrb[0].mxu0 %v577
    %v650 = vpop.f32.mrb[0].mxu0
    %v651 = vadd.f32 0.0, %v650
    %v652 = vpop.f32.mrb[0].mxu0
    %653 = vdwg.mxu0
    %v655 = vsel %vm524, %v567, 0
    %v658 = vsel %vm524, %v568, 0
    %660 = vmatprep.subr.mxu0 0.0
    %661 = vmatpush1.msra.mxu0 %v325
    %662 = vmatprep.subr.mxu0 0.0
    %663 = vmatpush1.msra.mxu0 %v330
    %664 = vmatprep.subr.mxu0 0.0
    %665 = vmatpush1.msra.mxu0 0.0
    %666 = vmatprep.subr.mxu0 0.0
    %667 = vmatpush1.msra.mxu0 0.0
    %668 = vmatprep.subr.mxu0 0.0
    %669 = vmatpush1.msra.mxu0 0.0
    %670 = vmatprep.subr.mxu0 0.0
    %671 = vmatpush1.msra.mxu0 0.0
    %672 = vmatprep.subr.mxu0 0.0
    %673 = vmatpush1.msra.mxu0 0.0
    %674 = vmatprep.subr.mxu0 0.0
    %675 = vmatpush1.msra.mxu0 0.0
    %676 = vmatprep.subr.mxu0 0.0
    %677 = vmatpush1.msra.mxu0 0.0
    %678 = vmatprep.subr.mxu0 0.0
    %679 = vmatpush1.msra.mxu0 0.0
    %680 = vmatprep.subr.mxu0 0.0
    %681 = vmatpush1.msra.mxu0 0.0
    %682 = vmatprep.subr.mxu0 0.0
    %683 = vmatpush1.msra.mxu0 0.0
    %684 = vmatprep.subr.mxu0 0.0
    %685 = vmatpush1.msra.mxu0 0.0
    %686 = vmatprep.subr.mxu0 0.0
    %687 = vmatpush1.msra.mxu0 0.0
    %688 = vmatprep.subr.mxu0 0.0
    %689 = vmatpush1.msra.mxu0 0.0
    %690 = vmatprep.subr.mxu0 0.0
    %691 = vmatpush1.msra.mxu0 0.0
    %692 = vmatprep.subr.mxu0 0.0
    %693 = vmatpush1.msra.mxu0 0.0
    %694 = vmatprep.subr.mxu0 0.0
    %695 = vmatpush1.msra.mxu0 0.0
    %696 = vmatprep.subr.mxu0 0.0
    %697 = vmatpush1.msra.mxu0 0.0
    %698 = vmatprep.subr.mxu0 0.0
    %699 = vmatpush1.msra.mxu0 0.0
    %700 = vmatprep.subr.mxu0 0.0
    %701 = vmatpush1.msra.mxu0 0.0
    %702 = vmatprep.subr.mxu0 0.0
    %703 = vmatpush1.msra.mxu0 0.0
    %704 = vmatprep.subr.mxu0 0.0
    %705 = vmatpush1.msra.mxu0 0.0
    %706 = vmatprep.subr.mxu0 0.0
    %707 = vmatpush1.msra.mxu0 0.0
    %708 = vmatprep.subr.mxu0 0.0
    %709 = vmatpush1.msra.mxu0 0.0
    %710 = vmatprep.subr.mxu0 0.0
    %711 = vmatpush1.msra.mxu0 0.0
    %712 = vmatprep.subr.mxu0 0.0
    %713 = vmatpush1.msra.mxu0 0.0
    %714 = vmatprep.subr.mxu0 0.0
    %715 = vmatpush1.msra.mxu0 0.0
    %716 = vmatprep.subr.mxu0 0.0
    %717 = vmatpush1.msra.mxu0 0.0
    %718 = vmatprep.subr.mxu0 0.0
    %719 = vmatpush1.msra.mxu0 0.0
    %720 = vmatprep.subr.mxu0 0.0
    %721 = vmatpush1.msra.mxu0 0.0
    %722 = vmatprep.subr.mxu0 0.0
    %723 = vmatpush1.msra.mxu0 0.0
    %724 = vmatprep.mubr.f32.mxu0 0.0
    %725 = vmatmul.mubr.f32.gmra.mrb[0].mxu0 %v655
    %v726 = vpop.f32.mrb[0].mxu0
    %v727 = vadd.f32 0.0, %v726
    %v728 = vpop.f32.mrb[0].mxu0
    %729 = vmatprep.mubr.f32.mxu0 0.0
    %730 = vmatmul.mubr.f32.gmra.mrb[0].mxu0 %v658
    %v731 = vpop.f32.mrb[0].mxu0
    %v732 = vadd.f32 0.0, %v731
    %v733 = vpop.f32.mrb[0].mxu0
    %734 = vdwg.mxu0
    %735 = vrot.lane.b32.xlu0 %v214, 96
    %v736 = vpop.permute.xlu0 %735
    %737 = vrot.lane.b32.xlu0 %v219, 96
    %v738 = vpop.permute.xlu0 %737
    %739 = vrot.lane.b32.xlu0 %v113, 96
    %v740 = vpop.permute.xlu0 %739
    %741 = vrot.lane.b32.xlu0 %v118, 96
    %v742 = vpop.permute.xlu0 %741
    %v743 = vsel %vm349, %v736, 0
    %v745 = vsel %vm349, %v738, 0
    %v747 = vsel %vm349, %v740, 0
    %v749 = vsel %vm349, %v742, 0
    %751 = vmatprep.subr.mxu0 0.0
    %752 = vmatpush1.xpose.msra.mxu0 %v747
    %753 = vmatprep.subr.mxu0 0.0
    %754 = vmatpush1.xpose.msra.mxu0 %v749
    %755 = vmatprep.subr.mxu0 0.0
    %756 = vmatpush1.xpose.msra.mxu0 0.0
    %757 = vmatprep.subr.mxu0 0.0
    %758 = vmatpush1.xpose.msra.mxu0 0.0
    %759 = vmatprep.subr.mxu0 0.0
    %760 = vmatpush1.xpose.msra.mxu0 0.0
    %761 = vmatprep.subr.mxu0 0.0
    %762 = vmatpush1.xpose.msra.mxu0 0.0
    %763 = vmatprep.subr.mxu0 0.0
    %764 = vmatpush1.xpose.msra.mxu0 0.0
    %765 = vmatprep.subr.mxu0 0.0
    %766 = vmatpush1.xpose.msra.mxu0 0.0
    %767 = vmatprep.subr.mxu0 0.0
    %768 = vmatpush1.xpose.msra.mxu0 0.0
    %769 = vmatprep.subr.mxu0 0.0
    %770 = vmatpush1.xpose.msra.mxu0 0.0
    %771 = vmatprep.subr.mxu0 0.0
    %772 = vmatpush1.xpose.msra.mxu0 0.0
    %773 = vmatprep.subr.mxu0 0.0
    %774 = vmatpush1.xpose.msra.mxu0 0.0
    %775 = vmatprep.subr.mxu0 0.0
    %776 = vmatpush1.xpose.msra.mxu0 0.0
    %777 = vmatprep.subr.mxu0 0.0
    %778 = vmatpush1.xpose.msra.mxu0 0.0
    %779 = vmatprep.subr.mxu0 0.0
    %780 = vmatpush1.xpose.msra.mxu0 0.0
    %781 = vmatprep.subr.mxu0 0.0
    %782 = vmatpush1.xpose.msra.mxu0 0.0
    %783 = vmatprep.subr.mxu0 0.0
    %784 = vmatpush1.xpose.msra.mxu0 0.0
    %785 = vmatprep.subr.mxu0 0.0
    %786 = vmatpush1.xpose.msra.mxu0 0.0
    %787 = vmatprep.subr.mxu0 0.0
    %788 = vmatpush1.xpose.msra.mxu0 0.0
    %789 = vmatprep.subr.mxu0 0.0
    %790 = vmatpush1.xpose.msra.mxu0 0.0
    %791 = vmatprep.subr.mxu0 0.0
    %792 = vmatpush1.xpose.msra.mxu0 0.0
    %793 = vmatprep.subr.mxu0 0.0
    %794 = vmatpush1.xpose.msra.mxu0 0.0
    %795 = vmatprep.subr.mxu0 0.0
    %796 = vmatpush1.xpose.msra.mxu0 0.0
    %797 = vmatprep.subr.mxu0 0.0
    %798 = vmatpush1.xpose.msra.mxu0 0.0
    %799 = vmatprep.subr.mxu0 0.0
    %800 = vmatpush1.xpose.msra.mxu0 0.0
    %801 = vmatprep.subr.mxu0 0.0
    %802 = vmatpush1.xpose.msra.mxu0 0.0
    %803 = vmatprep.subr.mxu0 0.0
    %804 = vmatpush1.xpose.msra.mxu0 0.0
    %805 = vmatprep.subr.mxu0 0.0
    %806 = vmatpush1.xpose.msra.mxu0 0.0
    %807 = vmatprep.subr.mxu0 0.0
    %808 = vmatpush1.xpose.msra.mxu0 0.0
    %809 = vmatprep.subr.mxu0 0.0
    %810 = vmatpush1.xpose.msra.mxu0 0.0
    %811 = vmatprep.subr.mxu0 0.0
    %812 = vmatpush1.xpose.msra.mxu0 0.0
    %813 = vmatprep.subr.mxu0 0.0
    %814 = vmatpush1.xpose.msra.mxu0 0.0
    %815 = vmatprep.mubr.f32.mxu0 0.0
    %816 = vmatmul.mubr.f32.gmra.mrb[0].mxu0 %v743
    %v817 = vpop.f32.mrb[0].mxu0
    %v818 = vadd.f32 0.0, %v817
    %v819 = vpop.f32.mrb[0].mxu0
    %820 = vmatprep.mubr.f32.mxu0 0.0
    %821 = vmatmul.mubr.f32.gmra.mrb[0].mxu0 %v745
    %v822 = vpop.f32.mrb[0].mxu0
    %v823 = vadd.f32 0.0, %v822
    %v824 = vpop.f32.mrb[0].mxu0
    %825 = vdwg.mxu0
    %826 = vrot.lane.b32.xlu0 %v224, 96
    %v827 = vpop.permute.xlu0 %826
    %828 = vrot.lane.b32.xlu0 %v229, 96
    %v829 = vpop.permute.xlu0 %828
    %830 = vrot.lane.b32.xlu0 %v123, 96
    %v831 = vpop.permute.xlu0 %830
    %832 = vrot.lane.b32.xlu0 %v128, 96
    %v833 = vpop.permute.xlu0 %832
    %v834 = vsel %vm349, %v827, 0
    %v836 = vsel %vm349, %v829, 0
    %v838 = vsel %vm349, %v831, 0
    %v840 = vsel %vm349, %v833, 0
    %842 = vmatprep.subr.mxu0 0.0
    %843 = vmatpush1.xpose.msra.mxu0 %v838
    %844 = vmatprep.subr.mxu0 0.0
    %845 = vmatpush1.xpose.msra.mxu0 %v840
    %846 = vmatprep.subr.mxu0 0.0
    %847 = vmatpush1.xpose.msra.mxu0 0.0
    %848 = vmatprep.subr.mxu0 0.0
    %849 = vmatpush1.xpose.msra.mxu0 0.0
    %850 = vmatprep.subr.mxu0 0.0
    %851 = vmatpush1.xpose.msra.mxu0 0.0
    %852 = vmatprep.subr.mxu0 0.0
    %853 = vmatpush1.xpose.msra.mxu0 0.0
    %854 = vmatprep.subr.mxu0 0.0
    %855 = vmatpush1.xpose.msra.mxu0 0.0
    %856 = vmatprep.subr.mxu0 0.0
    %857 = vmatpush1.xpose.msra.mxu0 0.0
    %858 = vmatprep.subr.mxu0 0.0
    %859 = vmatpush1.xpose.msra.mxu0 0.0
    %860 = vmatprep.subr.mxu0 0.0
    %861 = vmatpush1.xpose.msra.mxu0 0.0
    %862 = vmatprep.subr.mxu0 0.0
    %863 = vmatpush1.xpose.msra.mxu0 0.0
    %864 = vmatprep.subr.mxu0 0.0
    %865 = vmatpush1.xpose.msra.mxu0 0.0
    %866 = vmatprep.subr.mxu0 0.0
    %867 = vmatpush1.xpose.msra.mxu0 0.0
    %868 = vmatprep.subr.mxu0 0.0
    %869 = vmatpush1.xpose.msra.mxu0 0.0
    %870 = vmatprep.subr.mxu0 0.0
    %871 = vmatpush1.xpose.msra.mxu0 0.0
    %872 = vmatprep.subr.mxu0 0.0
    %873 = vmatpush1.xpose.msra.mxu0 0.0
    %874 = vmatprep.subr.mxu0 0.0
    %875 = vmatpush1.xpose.msra.mxu0 0.0
    %876 = vmatprep.subr.mxu0 0.0
    %877 = vmatpush1.xpose.msra.mxu0 0.0
    %878 = vmatprep.subr.mxu0 0.0
    %879 = vmatpush1.xpose.msra.mxu0 0.0
    %880 = vmatprep.subr.mxu0 0.0
    %881 = vmatpush1.xpose.msra.mxu0 0.0
    %882 = vmatprep.subr.mxu0 0.0
    %883 = vmatpush1.xpose.msra.mxu0 0.0
    %884 = vmatprep.subr.mxu0 0.0
    %885 = vmatpush1.xpose.msra.mxu0 0.0
    %886 = vmatprep.subr.mxu0 0.0
    %887 = vmatpush1.xpose.msra.mxu0 0.0
    %888 = vmatprep.subr.mxu0 0.0
    %889 = vmatpush1.xpose.msra.mxu0 0.0
    %890 = vmatprep.subr.mxu0 0.0
    %891 = vmatpush1.xpose.msra.mxu0 0.0
    %892 = vmatprep.subr.mxu0 0.0
    %893 = vmatpush1.xpose.msra.mxu0 0.0
    %894 = vmatprep.subr.mxu0 0.0
    %895 = vmatpush1.xpose.msra.mxu0 0.0
    %896 = vmatprep.subr.mxu0 0.0
    %897 = vmatpush1.xpose.msra.mxu0 0.0
    %898 = vmatprep.subr.mxu0 0.0
    %899 = vmatpush1.xpose.msra.mxu0 0.0
    %900 = vmatprep.subr.mxu0 0.0
    %901 = vmatpush1.xpose.msra.mxu0 0.0
    %902 = vmatprep.subr.mxu0 0.0
    %903 = vmatpush1.xpose.msra.mxu0 0.0
    %904 = vmatprep.subr.mxu0 0.0
    %905 = vmatpush1.xpose.msra.mxu0 0.0
    %906 = vmatprep.mubr.f32.mxu0 0.0
    %907 = vmatmul.mubr.f32.gmra.mrb[0].mxu0 %v834
    %v908 = vpop.f32.mrb[0].mxu0
    %v909 = vadd.f32 0.0, %v908
    %v910 = vpop.f32.mrb[0].mxu0
    %911 = vmatprep.mubr.f32.mxu0 0.0
    %912 = vmatmul.mubr.f32.gmra.mrb[0].mxu0 %v836
    %v913 = vpop.f32.mrb[0].mxu0
    %v914 = vadd.f32 0.0, %v913
    %v915 = vpop.f32.mrb[0].mxu0
    %916 = vdwg.mxu0
    %v917 = vsel %vm524, %v818, -inf
    %918 = vmax.xlane.f32.xlu0 %v917
    %v919 = vpop.xlane.xlu0 %918
    %v920 = vsel %vm524, %v823, -inf
    %921 = vmax.xlane.f32.xlu0 %v920
    %v922 = vpop.xlane.xlu0 %921
    %v923 = vsel %vm524, %v909, -inf
    %924 = vmax.xlane.f32.xlu0 %v923
    %v925 = vpop.xlane.xlu0 %924
    %v926 = vsel %vm524, %v914, -inf
    %927 = vmax.xlane.f32.xlu0 %v926
    %v928 = vpop.xlane.xlu0 %927
    %v929 = vsub.f32 %v818, %v919
    %v930 = vsub.f32 %v823, %v922
    %v931 = vsub.f32 %v909, %v925
    %v932 = vsub.f32 %v914, %v928
    %v933 = vmul.f32 %v929, 1.442695
    %v934 = vpow.pop %v933
    %v935 = vmul.f32 %v930, 1.442695
    %v936 = vpow.pop %v935
    %v937 = vmul.f32 %v931, 1.442695
    %v938 = vpow.pop %v937
    %v939 = vmul.f32 %v932, 1.442695
    %v940 = vpow.pop %v939
    %v941 = vsel %vm524, %v934, 0.0
    %942 = vadd.xlane.f32.xlu0 %v941
    %v943 = vpop.xlane.xlu0 %942
    %v944 = vsel %vm524, %v936, 0.0
    %945 = vadd.xlane.f32.xlu0 %v944
    %v946 = vpop.xlane.xlu0 %945
    %v947 = vsel %vm524, %v938, 0.0
    %948 = vadd.xlane.f32.xlu0 %v947
    %v949 = vpop.xlane.xlu0 %948
    %v950 = vsel %vm524, %v940, 0.0
    %951 = vadd.xlane.f32.xlu0 %v950
    %v952 = vpop.xlane.xlu0 %951
    %v953 = vrcp.pop %v943
    %v954 = vrcp.pop %v946
    %v955 = vrcp.pop %v949
    %v956 = vrcp.pop %v952
    %v957 = vmul.f32 %v934, %v953
    %v958 = vmul.f32 %v936, %v954
    %v959 = vmul.f32 %v938, %v955
    %v960 = vmul.f32 %v940, %v956
    %s961 = scalar_lea.vmem %s7, 32
    %962 = vst.msk [vmem:[%s961] sm:$0xff] %vm524, %v957
    %963 = vst.msk [vmem:[%s961 + $0x8] sm:$0xff] %vm524, %v958
    %964 = vst.msk [vmem:[%s961 + $0x10] sm:$0xff] %vm524, %v959
    %965 = vst.msk [vmem:[%s961 + $0x18] sm:$0xff] %vm524, %v960
    %968 = vrot.lane.b32.xlu0 %v315, 96
    %v969 = vpop.permute.xlu0 %968
    %970 = vrot.lane.b32.xlu0 %v320, 96
    %v971 = vpop.permute.xlu0 %970
    %v975 = vsel %vm524, %v957, 0
    %v978 = vsel %vm524, %v958, 0
    %980 = vmatprep.subr.mxu0 0.0
    %981 = vmatpush1.msra.mxu0 %v969
    %982 = vmatprep.subr.mxu0 0.0
    %983 = vmatpush1.msra.mxu0 %v971
    %984 = vmatprep.subr.mxu0 0.0
    %985 = vmatpush1.msra.mxu0 0.0
    %986 = vmatprep.subr.mxu0 0.0
    %987 = vmatpush1.msra.mxu0 0.0
    %988 = vmatprep.subr.mxu0 0.0
    %989 = vmatpush1.msra.mxu0 0.0
    %990 = vmatprep.subr.mxu0 0.0
    %991 = vmatpush1.msra.mxu0 0.0
    %992 = vmatprep.subr.mxu0 0.0
    %993 = vmatpush1.msra.mxu0 0.0
    %994 = vmatprep.subr.mxu0 0.0
    %995 = vmatpush1.msra.mxu0 0.0
    %996 = vmatprep.subr.mxu0 0.0
    %997 = vmatpush1.msra.mxu0 0.0
    %998 = vmatprep.subr.mxu0 0.0
    %999 = vmatpush1.msra.mxu0 0.0
    %1000 = vmatprep.subr.mxu0 0.0
    %1001 = vmatpush1.msra.mxu0 0.0
    %1002 = vmatprep.subr.mxu0 0.0
    %1003 = vmatpush1.msra.mxu0 0.0
    %1004 = vmatprep.subr.mxu0 0.0
    %1005 = vmatpush1.msra.mxu0 0.0
    %1006 = vmatprep.subr.mxu0 0.0
    %1007 = vmatpush1.msra.mxu0 0.0
    %1008 = vmatprep.subr.mxu0 0.0
    %1009 = vmatpush1.msra.mxu0 0.0
    %1010 = vmatprep.subr.mxu0 0.0
    %1011 = vmatpush1.msra.mxu0 0.0
    %1012 = vmatprep.subr.mxu0 0.0
    %1013 = vmatpush1.msra.mxu0 0.0
    %1014 = vmatprep.subr.mxu0 0.0
    %1015 = vmatpush1.msra.mxu0 0.0
    %1016 = vmatprep.subr.mxu0 0.0
    %1017 = vmatpush1.msra.mxu0 0.0
    %1018 = vmatprep.subr.mxu0 0.0
    %1019 = vmatpush1.msra.mxu0 0.0
    %1020 = vmatprep.subr.mxu0 0.0
    %1021 = vmatpush1.msra.mxu0 0.0
    %1022 = vmatprep.subr.mxu0 0.0
    %1023 = vmatpush1.msra.mxu0 0.0
    %1024 = vmatprep.subr.mxu0 0.0
    %1025 = vmatpush1.msra.mxu0 0.0
    %1026 = vmatprep.subr.mxu0 0.0
    %1027 = vmatpush1.msra.mxu0 0.0
    %1028 = vmatprep.subr.mxu0 0.0
    %1029 = vmatpush1.msra.mxu0 0.0
    %1030 = vmatprep.subr.mxu0 0.0
    %1031 = vmatpush1.msra.mxu0 0.0
    %1032 = vmatprep.subr.mxu0 0.0
    %1033 = vmatpush1.msra.mxu0 0.0
    %1034 = vmatprep.subr.mxu0 0.0
    %1035 = vmatpush1.msra.mxu0 0.0
    %1036 = vmatprep.subr.mxu0 0.0
    %1037 = vmatpush1.msra.mxu0 0.0
    %1038 = vmatprep.subr.mxu0 0.0
    %1039 = vmatpush1.msra.mxu0 0.0
    %1040 = vmatprep.subr.mxu0 0.0
    %1041 = vmatpush1.msra.mxu0 0.0
    %1042 = vmatprep.subr.mxu0 0.0
    %1043 = vmatpush1.msra.mxu0 0.0
    %1044 = vmatprep.mubr.f32.mxu0 0.0
    %1045 = vmatmul.mubr.f32.gmra.mrb[0].mxu0 %v975
    %v1046 = vpop.f32.mrb[0].mxu0
    %v1047 = vadd.f32 0.0, %v1046
    %v1048 = vpop.f32.mrb[0].mxu0
    %1049 = vmatprep.mubr.f32.mxu0 0.0
    %1050 = vmatmul.mubr.f32.gmra.mrb[0].mxu0 %v978
    %v1051 = vpop.f32.mrb[0].mxu0
    %v1052 = vadd.f32 0.0, %v1051
    %v1053 = vpop.f32.mrb[0].mxu0
    %1054 = vdwg.mxu0
    %1057 = vrot.lane.b32.xlu0 %v325, 96
    %v1058 = vpop.permute.xlu0 %1057
    %1059 = vrot.lane.b32.xlu0 %v330, 96
    %v1060 = vpop.permute.xlu0 %1059
    %v1064 = vsel %vm524, %v959, 0
    %v1067 = vsel %vm524, %v960, 0
    %1069 = vmatprep.subr.mxu0 0.0
    %1070 = vmatpush1.msra.mxu0 %v1058
    %1071 = vmatprep.subr.mxu0 0.0
    %1072 = vmatpush1.msra.mxu0 %v1060
    %1073 = vmatprep.subr.mxu0 0.0
    %1074 = vmatpush1.msra.mxu0 0.0
    %1075 = vmatprep.subr.mxu0 0.0
    %1076 = vmatpush1.msra.mxu0 0.0
    %1077 = vmatprep.subr.mxu0 0.0
    %1078 = vmatpush1.msra.mxu0 0.0
    %1079 = vmatprep.subr.mxu0 0.0
    %1080 = vmatpush1.msra.mxu0 0.0
    %1081 = vmatprep.subr.mxu0 0.0
    %1082 = vmatpush1.msra.mxu0 0.0
    %1083 = vmatprep.subr.mxu0 0.0
    %1084 = vmatpush1.msra.mxu0 0.0
    %1085 = vmatprep.subr.mxu0 0.0
    %1086 = vmatpush1.msra.mxu0 0.0
    %1087 = vmatprep.subr.mxu0 0.0
    %1088 = vmatpush1.msra.mxu0 0.0
    %1089 = vmatprep.subr.mxu0 0.0
    %1090 = vmatpush1.msra.mxu0 0.0
    %1091 = vmatprep.subr.mxu0 0.0
    %1092 = vmatpush1.msra.mxu0 0.0
    %1093 = vmatprep.subr.mxu0 0.0
    %1094 = vmatpush1.msra.mxu0 0.0
    %1095 = vmatprep.subr.mxu0 0.0
    %1096 = vmatpush1.msra.mxu0 0.0
    %1097 = vmatprep.subr.mxu0 0.0
    %1098 = vmatpush1.msra.mxu0 0.0
    %1099 = vmatprep.subr.mxu0 0.0
    %1100 = vmatpush1.msra.mxu0 0.0
    %1101 = vmatprep.subr.mxu0 0.0
    %1102 = vmatpush1.msra.mxu0 0.0
    %1103 = vmatprep.subr.mxu0 0.0
    %1104 = vmatpush1.msra.mxu0 0.0
    %1105 = vmatprep.subr.mxu0 0.0
    %1106 = vmatpush1.msra.mxu0 0.0
    %1107 = vmatprep.subr.mxu0 0.0
    %1108 = vmatpush1.msra.mxu0 0.0
    %1109 = vmatprep.subr.mxu0 0.0
    %1110 = vmatpush1.msra.mxu0 0.0
    %1111 = vmatprep.subr.mxu0 0.0
    %1112 = vmatpush1.msra.mxu0 0.0
    %1113 = vmatprep.subr.mxu0 0.0
    %1114 = vmatpush1.msra.mxu0 0.0
    %1115 = vmatprep.subr.mxu0 0.0
    %1116 = vmatpush1.msra.mxu0 0.0
    %1117 = vmatprep.subr.mxu0 0.0
    %1118 = vmatpush1.msra.mxu0 0.0
    %1119 = vmatprep.subr.mxu0 0.0
    %1120 = vmatpush1.msra.mxu0 0.0
    %1121 = vmatprep.subr.mxu0 0.0
    %1122 = vmatpush1.msra.mxu0 0.0
    %1123 = vmatprep.subr.mxu0 0.0
    %1124 = vmatpush1.msra.mxu0 0.0
    %1125 = vmatprep.subr.mxu0 0.0
    %1126 = vmatpush1.msra.mxu0 0.0
    %1127 = vmatprep.subr.mxu0 0.0
    %1128 = vmatpush1.msra.mxu0 0.0
    %1129 = vmatprep.subr.mxu0 0.0
    %1130 = vmatpush1.msra.mxu0 0.0
    %1131 = vmatprep.subr.mxu0 0.0
    %1132 = vmatpush1.msra.mxu0 0.0
    %1133 = vmatprep.mubr.f32.mxu0 0.0
    %1134 = vmatmul.mubr.f32.gmra.mrb[0].mxu0 %v1064
    %v1135 = vpop.f32.mrb[0].mxu0
    %v1136 = vadd.f32 0.0, %v1135
    %v1137 = vpop.f32.mrb[0].mxu0
    %1138 = vmatprep.mubr.f32.mxu0 0.0
    %1139 = vmatmul.mubr.f32.gmra.mrb[0].mxu0 %v1067
    %v1140 = vpop.f32.mrb[0].mxu0
    %v1141 = vadd.f32 0.0, %v1140
    %v1142 = vpop.f32.mrb[0].mxu0
    %1143 = vdwg.mxu0
    %v1145 = vsel %vm349, %v1047, 0
    %v1148 = vsel %vm349, %v1052, 0
    %v1151 = vsel %vm349, %v1136, 0
    %v1154 = vsel %vm349, %v1141, 0
    %1156 = vmatprep.subr.mxu0 0.0
    %1157 = vmatpush1.msra.mxu0 %v337
    %1158 = vmatprep.subr.mxu0 0.0
    %1159 = vmatpush1.msra.mxu0 %v338
    %1160 = vmatprep.subr.mxu0 0.0
    %1161 = vmatpush1.msra.mxu0 %v339
    %1162 = vmatprep.subr.mxu0 0.0
    %1163 = vmatpush1.msra.mxu0 %v340
    %1164 = vmatprep.subr.mxu0 0.0
    %1165 = vmatpush1.msra.mxu0 0.0
    %1166 = vmatprep.subr.mxu0 0.0
    %1167 = vmatpush1.msra.mxu0 0.0
    %1168 = vmatprep.subr.mxu0 0.0
    %1169 = vmatpush1.msra.mxu0 0.0
    %1170 = vmatprep.subr.mxu0 0.0
    %1171 = vmatpush1.msra.mxu0 0.0
    %1172 = vmatprep.subr.mxu0 0.0
    %1173 = vmatpush1.msra.mxu0 0.0
    %1174 = vmatprep.subr.mxu0 0.0
    %1175 = vmatpush1.msra.mxu0 0.0
    %1176 = vmatprep.subr.mxu0 0.0
    %1177 = vmatpush1.msra.mxu0 0.0
    %1178 = vmatprep.subr.mxu0 0.0
    %1179 = vmatpush1.msra.mxu0 0.0
    %1180 = vmatprep.subr.mxu0 0.0
    %1181 = vmatpush1.msra.mxu0 0.0
    %1182 = vmatprep.subr.mxu0 0.0
    %1183 = vmatpush1.msra.mxu0 0.0
    %1184 = vmatprep.subr.mxu0 0.0
    %1185 = vmatpush1.msra.mxu0 0.0
    %1186 = vmatprep.subr.mxu0 0.0
    %1187 = vmatpush1.msra.mxu0 0.0
    %1188 = vmatprep.subr.mxu0 0.0
    %1189 = vmatpush1.msra.mxu0 0.0
    %1190 = vmatprep.subr.mxu0 0.0
    %1191 = vmatpush1.msra.mxu0 0.0
    %1192 = vmatprep.subr.mxu0 0.0
    %1193 = vmatpush1.msra.mxu0 0.0
    %1194 = vmatprep.subr.mxu0 0.0
    %1195 = vmatpush1.msra.mxu0 0.0
    %1196 = vmatprep.subr.mxu0 0.0
    %1197 = vmatpush1.msra.mxu0 0.0
    %1198 = vmatprep.subr.mxu0 0.0
    %1199 = vmatpush1.msra.mxu0 0.0
    %1200 = vmatprep.subr.mxu0 0.0
    %1201 = vmatpush1.msra.mxu0 0.0
    %1202 = vmatprep.subr.mxu0 0.0
    %1203 = vmatpush1.msra.mxu0 0.0
    %1204 = vmatprep.subr.mxu0 0.0
    %1205 = vmatpush1.msra.mxu0 0.0
    %1206 = vmatprep.subr.mxu0 0.0
    %1207 = vmatpush1.msra.mxu0 0.0
    %1208 = vmatprep.subr.mxu0 0.0
    %1209 = vmatpush1.msra.mxu0 0.0
    %1210 = vmatprep.subr.mxu0 0.0
    %1211 = vmatpush1.msra.mxu0 0.0
    %1212 = vmatprep.subr.mxu0 0.0
    %1213 = vmatpush1.msra.mxu0 0.0
    %1214 = vmatprep.subr.mxu0 0.0
    %1215 = vmatpush1.msra.mxu0 0.0
    %1216 = vmatprep.subr.mxu0 0.0
    %1217 = vmatpush1.msra.mxu0 0.0
    %1218 = vmatprep.subr.mxu0 0.0
    %1219 = vmatpush1.msra.mxu0 0.0
    %1220 = vmatprep.mubr.f32.mxu0 0.0
    %1221 = vmatmul.mubr.f32.gmra.mrb[0].mxu0 %v1145
    %v1222 = vpop.f32.mrb[0].mxu0
    %v1223 = vadd.f32 0.0, %v1222
    %v1224 = vpop.f32.mrb[0].mxu0
    %1225 = vmatprep.mubr.f32.mxu0 0.0
    %1226 = vmatmul.mubr.f32.gmra.mrb[0].mxu0 %v1148
    %v1227 = vpop.f32.mrb[0].mxu0
    %v1228 = vadd.f32 0.0, %v1227
    %v1229 = vpop.f32.mrb[0].mxu0
    %1230 = vmatprep.mubr.f32.mxu0 0.0
    %1231 = vmatmul.mubr.f32.gmra.mrb[0].mxu0 %v1151
    %v1232 = vpop.f32.mrb[0].mxu0
    %v1233 = vadd.f32 0.0, %v1232
    %v1234 = vpop.f32.mrb[0].mxu0
    %1235 = vmatprep.mubr.f32.mxu0 0.0
    %1236 = vmatmul.mubr.f32.gmra.mrb[0].mxu0 %v1154
    %v1237 = vpop.f32.mrb[0].mxu0
    %v1238 = vadd.f32 0.0, %v1237
    %v1239 = vpop.f32.mrb[0].mxu0
    %1240 = vdwg.mxu0
    %v1242 = vsel %vm349, %v646, 0
    %v1245 = vsel %vm349, %v651, 0
    %v1248 = vsel %vm349, %v727, 0
    %v1251 = vsel %vm349, %v732, 0
    %1253 = vmatprep.subr.mxu0 0.0
    %1254 = vmatpush1.msra.mxu0 %v333
    %1255 = vmatprep.subr.mxu0 0.0
    %1256 = vmatpush1.msra.mxu0 %v334
    %1257 = vmatprep.subr.mxu0 0.0
    %1258 = vmatpush1.msra.mxu0 %v335
    %1259 = vmatprep.subr.mxu0 0.0
    %1260 = vmatpush1.msra.mxu0 %v336
    %1261 = vmatprep.subr.mxu0 0.0
    %1262 = vmatpush1.msra.mxu0 0.0
    %1263 = vmatprep.subr.mxu0 0.0
    %1264 = vmatpush1.msra.mxu0 0.0
    %1265 = vmatprep.subr.mxu0 0.0
    %1266 = vmatpush1.msra.mxu0 0.0
    %1267 = vmatprep.subr.mxu0 0.0
    %1268 = vmatpush1.msra.mxu0 0.0
    %1269 = vmatprep.subr.mxu0 0.0
    %1270 = vmatpush1.msra.mxu0 0.0
    %1271 = vmatprep.subr.mxu0 0.0
    %1272 = vmatpush1.msra.mxu0 0.0
    %1273 = vmatprep.subr.mxu0 0.0
    %1274 = vmatpush1.msra.mxu0 0.0
    %1275 = vmatprep.subr.mxu0 0.0
    %1276 = vmatpush1.msra.mxu0 0.0
    %1277 = vmatprep.subr.mxu0 0.0
    %1278 = vmatpush1.msra.mxu0 0.0
    %1279 = vmatprep.subr.mxu0 0.0
    %1280 = vmatpush1.msra.mxu0 0.0
    %1281 = vmatprep.subr.mxu0 0.0
    %1282 = vmatpush1.msra.mxu0 0.0
    %1283 = vmatprep.subr.mxu0 0.0
    %1284 = vmatpush1.msra.mxu0 0.0
    %1285 = vmatprep.subr.mxu0 0.0
    %1286 = vmatpush1.msra.mxu0 0.0
    %1287 = vmatprep.subr.mxu0 0.0
    %1288 = vmatpush1.msra.mxu0 0.0
    %1289 = vmatprep.subr.mxu0 0.0
    %1290 = vmatpush1.msra.mxu0 0.0
    %1291 = vmatprep.subr.mxu0 0.0
    %1292 = vmatpush1.msra.mxu0 0.0
    %1293 = vmatprep.subr.mxu0 0.0
    %1294 = vmatpush1.msra.mxu0 0.0
    %1295 = vmatprep.subr.mxu0 0.0
    %1296 = vmatpush1.msra.mxu0 0.0
    %1297 = vmatprep.subr.mxu0 0.0
    %1298 = vmatpush1.msra.mxu0 0.0
    %1299 = vmatprep.subr.mxu0 0.0
    %1300 = vmatpush1.msra.mxu0 0.0
    %1301 = vmatprep.subr.mxu0 0.0
    %1302 = vmatpush1.msra.mxu0 0.0
    %1303 = vmatprep.subr.mxu0 0.0
    %1304 = vmatpush1.msra.mxu0 0.0
    %1305 = vmatprep.subr.mxu0 0.0
    %1306 = vmatpush1.msra.mxu0 0.0
    %1307 = vmatprep.subr.mxu0 0.0
    %1308 = vmatpush1.msra.mxu0 0.0
    %1309 = vmatprep.subr.mxu0 0.0
    %1310 = vmatpush1.msra.mxu0 0.0
    %1311 = vmatprep.subr.mxu0 0.0
    %1312 = vmatpush1.msra.mxu0 0.0
    %1313 = vmatprep.subr.mxu0 0.0
    %1314 = vmatpush1.msra.mxu0 0.0
    %1315 = vmatprep.subr.mxu0 0.0
    %1316 = vmatpush1.msra.mxu0 0.0
    %1317 = vmatprep.mubr.f32.mxu0 0.0
    %1318 = vmatmul.mubr.f32.gmra.mrb[0].mxu0 %v1242
    %v1319 = vpop.f32.mrb[0].mxu0
    %v1320 = vadd.f32 %v1223, %v1319
    %v1321 = vpop.f32.mrb[0].mxu0
    %1322 = vmatprep.mubr.f32.mxu0 0.0
    %1323 = vmatmul.mubr.f32.gmra.mrb[0].mxu0 %v1245
    %v1324 = vpop.f32.mrb[0].mxu0
    %v1325 = vadd.f32 %v1228, %v1324
    %v1326 = vpop.f32.mrb[0].mxu0
    %1327 = vmatprep.mubr.f32.mxu0 0.0
    %1328 = vmatmul.mubr.f32.gmra.mrb[0].mxu0 %v1248
    %v1329 = vpop.f32.mrb[0].mxu0
    %v1330 = vadd.f32 %v1233, %v1329
    %v1331 = vpop.f32.mrb[0].mxu0
    %1332 = vmatprep.mubr.f32.mxu0 0.0
    %1333 = vmatmul.mubr.f32.gmra.mrb[0].mxu0 %v1251
    %v1334 = vpop.f32.mrb[0].mxu0
    %v1335 = vadd.f32 %v1238, %v1334
    %v1336 = vpop.f32.mrb[0].mxu0
    %1337 = vdwg.mxu0
    %1338 = vrot.lane.b32.xlu0 %v214, 64
    %v1339 = vpop.permute.xlu0 %1338
    %1340 = vrot.lane.b32.xlu0 %v219, 64
    %v1341 = vpop.permute.xlu0 %1340
    %1342 = vrot.lane.b32.xlu0 %v113, 64
    %v1343 = vpop.permute.xlu0 %1342
    %1344 = vrot.lane.b32.xlu0 %v118, 64
    %v1345 = vpop.permute.xlu0 %1344
    %v1346 = vsel %vm349, %v1339, 0
    %v1348 = vsel %vm349, %v1341, 0
    %v1350 = vsel %vm349, %v1343, 0
    %v1352 = vsel %vm349, %v1345, 0
    %1354 = vmatprep.subr.mxu0 0.0
    %1355 = vmatpush1.xpose.msra.mxu0 %v1350
    %1356 = vmatprep.subr.mxu0 0.0
    %1357 = vmatpush1.xpose.msra.mxu0 %v1352
    %1358 = vmatprep.subr.mxu0 0.0
    %1359 = vmatpush1.xpose.msra.mxu0 0.0
    %1360 = vmatprep.subr.mxu0 0.0
    %1361 = vmatpush1.xpose.msra.mxu0 0.0
    %1362 = vmatprep.subr.mxu0 0.0
    %1363 = vmatpush1.xpose.msra.mxu0 0.0
    %1364 = vmatprep.subr.mxu0 0.0
    %1365 = vmatpush1.xpose.msra.mxu0 0.0
    %1366 = vmatprep.subr.mxu0 0.0
    %1367 = vmatpush1.xpose.msra.mxu0 0.0
    %1368 = vmatprep.subr.mxu0 0.0
    %1369 = vmatpush1.xpose.msra.mxu0 0.0
    %1370 = vmatprep.subr.mxu0 0.0
    %1371 = vmatpush1.xpose.msra.mxu0 0.0
    %1372 = vmatprep.subr.mxu0 0.0
    %1373 = vmatpush1.xpose.msra.mxu0 0.0
    %1374 = vmatprep.subr.mxu0 0.0
    %1375 = vmatpush1.xpose.msra.mxu0 0.0
    %1376 = vmatprep.subr.mxu0 0.0
    %1377 = vmatpush1.xpose.msra.mxu0 0.0
    %1378 = vmatprep.subr.mxu0 0.0
    %1379 = vmatpush1.xpose.msra.mxu0 0.0
    %1380 = vmatprep.subr.mxu0 0.0
    %1381 = vmatpush1.xpose.msra.mxu0 0.0
    %1382 = vmatprep.subr.mxu0 0.0
    %1383 = vmatpush1.xpose.msra.mxu0 0.0
    %1384 = vmatprep.subr.mxu0 0.0
    %1385 = vmatpush1.xpose.msra.mxu0 0.0
    %1386 = vmatprep.subr.mxu0 0.0
    %1387 = vmatpush1.xpose.msra.mxu0 0.0
    %1388 = vmatprep.subr.mxu0 0.0
    %1389 = vmatpush1.xpose.msra.mxu0 0.0
    %1390 = vmatprep.subr.mxu0 0.0
    %1391 = vmatpush1.xpose.msra.mxu0 0.0
    %1392 = vmatprep.subr.mxu0 0.0
    %1393 = vmatpush1.xpose.msra.mxu0 0.0
    %1394 = vmatprep.subr.mxu0 0.0
    %1395 = vmatpush1.xpose.msra.mxu0 0.0
    %1396 = vmatprep.subr.mxu0 0.0
    %1397 = vmatpush1.xpose.msra.mxu0 0.0
    %1398 = vmatprep.subr.mxu0 0.0
    %1399 = vmatpush1.xpose.msra.mxu0 0.0
    %1400 = vmatprep.subr.mxu0 0.0
    %1401 = vmatpush1.xpose.msra.mxu0 0.0
    %1402 = vmatprep.subr.mxu0 0.0
    %1403 = vmatpush1.xpose.msra.mxu0 0.0
    %1404 = vmatprep.subr.mxu0 0.0
    %1405 = vmatpush1.xpose.msra.mxu0 0.0
    %1406 = vmatprep.subr.mxu0 0.0
    %1407 = vmatpush1.xpose.msra.mxu0 0.0
    %1408 = vmatprep.subr.mxu0 0.0
    %1409 = vmatpush1.xpose.msra.mxu0 0.0
    %1410 = vmatprep.subr.mxu0 0.0
    %1411 = vmatpush1.xpose.msra.mxu0 0.0
    %1412 = vmatprep.subr.mxu0 0.0
    %1413 = vmatpush1.xpose.msra.mxu0 0.0
    %1414 = vmatprep.subr.mxu0 0.0
    %1415 = vmatpush1.xpose.msra.mxu0 0.0
    %1416 = vmatprep.subr.mxu0 0.0
    %1417 = vmatpush1.xpose.msra.mxu0 0.0
    %1418 = vmatprep.mubr.f32.mxu0 0.0
    %1419 = vmatmul.mubr.f32.gmra.mrb[0].mxu0 %v1346
    %v1420 = vpop.f32.mrb[0].mxu0
    %v1421 = vadd.f32 0.0, %v1420
    %v1422 = vpop.f32.mrb[0].mxu0
    %1423 = vmatprep.mubr.f32.mxu0 0.0
    %1424 = vmatmul.mubr.f32.gmra.mrb[0].mxu0 %v1348
    %v1425 = vpop.f32.mrb[0].mxu0
    %v1426 = vadd.f32 0.0, %v1425
    %v1427 = vpop.f32.mrb[0].mxu0
    %1428 = vdwg.mxu0
    %1429 = vrot.lane.b32.xlu0 %v224, 64
    %v1430 = vpop.permute.xlu0 %1429
    %1431 = vrot.lane.b32.xlu0 %v229, 64
    %v1432 = vpop.permute.xlu0 %1431
    %1433 = vrot.lane.b32.xlu0 %v123, 64
    %v1434 = vpop.permute.xlu0 %1433
    %1435 = vrot.lane.b32.xlu0 %v128, 64
    %v1436 = vpop.permute.xlu0 %1435
    %v1437 = vsel %vm349, %v1430, 0
    %v1439 = vsel %vm349, %v1432, 0
    %v1441 = vsel %vm349, %v1434, 0
    %v1443 = vsel %vm349, %v1436, 0
    %1445 = vmatprep.subr.mxu0 0.0
    %1446 = vmatpush1.xpose.msra.mxu0 %v1441
    %1447 = vmatprep.subr.mxu0 0.0
    %1448 = vmatpush1.xpose.msra.mxu0 %v1443
    %1449 = vmatprep.subr.mxu0 0.0
    %1450 = vmatpush1.xpose.msra.mxu0 0.0
    %1451 = vmatprep.subr.mxu0 0.0
    %1452 = vmatpush1.xpose.msra.mxu0 0.0
    %1453 = vmatprep.subr.mxu0 0.0
    %1454 = vmatpush1.xpose.msra.mxu0 0.0
    %1455 = vmatprep.subr.mxu0 0.0
    %1456 = vmatpush1.xpose.msra.mxu0 0.0
    %1457 = vmatprep.subr.mxu0 0.0
    %1458 = vmatpush1.xpose.msra.mxu0 0.0
    %1459 = vmatprep.subr.mxu0 0.0
    %1460 = vmatpush1.xpose.msra.mxu0 0.0
    %1461 = vmatprep.subr.mxu0 0.0
    %1462 = vmatpush1.xpose.msra.mxu0 0.0
    %1463 = vmatprep.subr.mxu0 0.0
    %1464 = vmatpush1.xpose.msra.mxu0 0.0
    %1465 = vmatprep.subr.mxu0 0.0
    %1466 = vmatpush1.xpose.msra.mxu0 0.0
    %1467 = vmatprep.subr.mxu0 0.0
    %1468 = vmatpush1.xpose.msra.mxu0 0.0
    %1469 = vmatprep.subr.mxu0 0.0
    %1470 = vmatpush1.xpose.msra.mxu0 0.0
    %1471 = vmatprep.subr.mxu0 0.0
    %1472 = vmatpush1.xpose.msra.mxu0 0.0
    %1473 = vmatprep.subr.mxu0 0.0
    %1474 = vmatpush1.xpose.msra.mxu0 0.0
    %1475 = vmatprep.subr.mxu0 0.0
    %1476 = vmatpush1.xpose.msra.mxu0 0.0
    %1477 = vmatprep.subr.mxu0 0.0
    %1478 = vmatpush1.xpose.msra.mxu0 0.0
    %1479 = vmatprep.subr.mxu0 0.0
    %1480 = vmatpush1.xpose.msra.mxu0 0.0
    %1481 = vmatprep.subr.mxu0 0.0
    %1482 = vmatpush1.xpose.msra.mxu0 0.0
    %1483 = vmatprep.subr.mxu0 0.0
    %1484 = vmatpush1.xpose.msra.mxu0 0.0
    %1485 = vmatprep.subr.mxu0 0.0
    %1486 = vmatpush1.xpose.msra.mxu0 0.0
    %1487 = vmatprep.subr.mxu0 0.0
    %1488 = vmatpush1.xpose.msra.mxu0 0.0
    %1489 = vmatprep.subr.mxu0 0.0
    %1490 = vmatpush1.xpose.msra.mxu0 0.0
    %1491 = vmatprep.subr.mxu0 0.0
    %1492 = vmatpush1.xpose.msra.mxu0 0.0
    %1493 = vmatprep.subr.mxu0 0.0
    %1494 = vmatpush1.xpose.msra.mxu0 0.0
    %1495 = vmatprep.subr.mxu0 0.0
    %1496 = vmatpush1.xpose.msra.mxu0 0.0
    %1497 = vmatprep.subr.mxu0 0.0
    %1498 = vmatpush1.xpose.msra.mxu0 0.0
    %1499 = vmatprep.subr.mxu0 0.0
    %1500 = vmatpush1.xpose.msra.mxu0 0.0
    %1501 = vmatprep.subr.mxu0 0.0
    %1502 = vmatpush1.xpose.msra.mxu0 0.0
    %1503 = vmatprep.subr.mxu0 0.0
    %1504 = vmatpush1.xpose.msra.mxu0 0.0
    %1505 = vmatprep.subr.mxu0 0.0
    %1506 = vmatpush1.xpose.msra.mxu0 0.0
    %1507 = vmatprep.subr.mxu0 0.0
    %1508 = vmatpush1.xpose.msra.mxu0 0.0
    %1509 = vmatprep.mubr.f32.mxu0 0.0
    %1510 = vmatmul.mubr.f32.gmra.mrb[0].mxu0 %v1437
    %v1511 = vpop.f32.mrb[0].mxu0
    %v1512 = vadd.f32 0.0, %v1511
    %v1513 = vpop.f32.mrb[0].mxu0
    %1514 = vmatprep.mubr.f32.mxu0 0.0
    %1515 = vmatmul.mubr.f32.gmra.mrb[0].mxu0 %v1439
    %v1516 = vpop.f32.mrb[0].mxu0
    %v1517 = vadd.f32 0.0, %v1516
    %v1518 = vpop.f32.mrb[0].mxu0
    %1519 = vdwg.mxu0
    %v1520 = vsel %vm524, %v1421, -inf
    %1521 = vmax.xlane.f32.xlu0 %v1520
    %v1522 = vpop.xlane.xlu0 %1521
    %v1523 = vsel %vm524, %v1426, -inf
    %1524 = vmax.xlane.f32.xlu0 %v1523
    %v1525 = vpop.xlane.xlu0 %1524
    %v1526 = vsel %vm524, %v1512, -inf
    %1527 = vmax.xlane.f32.xlu0 %v1526
    %v1528 = vpop.xlane.xlu0 %1527
    %v1529 = vsel %vm524, %v1517, -inf
    %1530 = vmax.xlane.f32.xlu0 %v1529
    %v1531 = vpop.xlane.xlu0 %1530
    %v1532 = vsub.f32 %v1421, %v1522
    %v1533 = vsub.f32 %v1426, %v1525
    %v1534 = vsub.f32 %v1512, %v1528
    %v1535 = vsub.f32 %v1517, %v1531
    %v1536 = vmul.f32 %v1532, 1.442695
    %v1537 = vpow.pop %v1536
    %v1538 = vmul.f32 %v1533, 1.442695
    %v1539 = vpow.pop %v1538
    %v1540 = vmul.f32 %v1534, 1.442695
    %v1541 = vpow.pop %v1540
    %v1542 = vmul.f32 %v1535, 1.442695
    %v1543 = vpow.pop %v1542
    %v1544 = vsel %vm524, %v1537, 0.0
    %1545 = vadd.xlane.f32.xlu0 %v1544
    %v1546 = vpop.xlane.xlu0 %1545
    %v1547 = vsel %vm524, %v1539, 0.0
    %1548 = vadd.xlane.f32.xlu0 %v1547
    %v1549 = vpop.xlane.xlu0 %1548
    %v1550 = vsel %vm524, %v1541, 0.0
    %1551 = vadd.xlane.f32.xlu0 %v1550
    %v1552 = vpop.xlane.xlu0 %1551
    %v1553 = vsel %vm524, %v1543, 0.0
    %1554 = vadd.xlane.f32.xlu0 %v1553
    %v1555 = vpop.xlane.xlu0 %1554
    %v1556 = vrcp.pop %v1546
    %v1557 = vrcp.pop %v1549
    %v1558 = vrcp.pop %v1552
    %v1559 = vrcp.pop %v1555
    %v1560 = vmul.f32 %v1537, %v1556
    %v1561 = vmul.f32 %v1539, %v1557
    %v1562 = vmul.f32 %v1541, %v1558
    %v1563 = vmul.f32 %v1543, %v1559
    %s1564 = scalar_lea.vmem %s7, 64
    %1565 = vst.msk [vmem:[%s1564] sm:$0xff] %vm524, %v1560
    %1566 = vst.msk [vmem:[%s1564 + $0x8] sm:$0xff] %vm524, %v1561
    %1567 = vst.msk [vmem:[%s1564 + $0x10] sm:$0xff] %vm524, %v1562
    %1568 = vst.msk [vmem:[%s1564 + $0x18] sm:$0xff] %vm524, %v1563
    %1569 = vrot.lane.b32.xlu0 %v315, 64
    %v1570 = vpop.permute.xlu0 %1569
    %1571 = vrot.lane.b32.xlu0 %v320, 64
    %v1572 = vpop.permute.xlu0 %1571
    %v1576 = vsel %vm524, %v1560, 0
    %v1579 = vsel %vm524, %v1561, 0
    %1581 = vmatprep.subr.mxu0 0.0
    %1582 = vmatpush1.msra.mxu0 %v1570
    %1583 = vmatprep.subr.mxu0 0.0
    %1584 = vmatpush1.msra.mxu0 %v1572
    %1585 = vmatprep.subr.mxu0 0.0
    %1586 = vmatpush1.msra.mxu0 0.0
    %1587 = vmatprep.subr.mxu0 0.0
    %1588 = vmatpush1.msra.mxu0 0.0
    %1589 = vmatprep.subr.mxu0 0.0
    %1590 = vmatpush1.msra.mxu0 0.0
    %1591 = vmatprep.subr.mxu0 0.0
    %1592 = vmatpush1.msra.mxu0 0.0
    %1593 = vmatprep.subr.mxu0 0.0
    %1594 = vmatpush1.msra.mxu0 0.0
    %1595 = vmatprep.subr.mxu0 0.0
    %1596 = vmatpush1.msra.mxu0 0.0
    %1597 = vmatprep.subr.mxu0 0.0
    %1598 = vmatpush1.msra.mxu0 0.0
    %1599 = vmatprep.subr.mxu0 0.0
    %1600 = vmatpush1.msra.mxu0 0.0
    %1601 = vmatprep.subr.mxu0 0.0
    %1602 = vmatpush1.msra.mxu0 0.0
    %1603 = vmatprep.subr.mxu0 0.0
    %1604 = vmatpush1.msra.mxu0 0.0
    %1605 = vmatprep.subr.mxu0 0.0
    %1606 = vmatpush1.msra.mxu0 0.0
    %1607 = vmatprep.subr.mxu0 0.0
    %1608 = vmatpush1.msra.mxu0 0.0
    %1609 = vmatprep.subr.mxu0 0.0
    %1610 = vmatpush1.msra.mxu0 0.0
    %1611 = vmatprep.subr.mxu0 0.0
    %1612 = vmatpush1.msra.mxu0 0.0
    %1613 = vmatprep.subr.mxu0 0.0
    %1614 = vmatpush1.msra.mxu0 0.0
    %1615 = vmatprep.subr.mxu0 0.0
    %1616 = vmatpush1.msra.mxu0 0.0
    %1617 = vmatprep.subr.mxu0 0.0
    %1618 = vmatpush1.msra.mxu0 0.0
    %1619 = vmatprep.subr.mxu0 0.0
    %1620 = vmatpush1.msra.mxu0 0.0
    %1621 = vmatprep.subr.mxu0 0.0
    %1622 = vmatpush1.msra.mxu0 0.0
    %1623 = vmatprep.subr.mxu0 0.0
    %1624 = vmatpush1.msra.mxu0 0.0
    %1625 = vmatprep.subr.mxu0 0.0
    %1626 = vmatpush1.msra.mxu0 0.0
    %1627 = vmatprep.subr.mxu0 0.0
    %1628 = vmatpush1.msra.mxu0 0.0
    %1629 = vmatprep.subr.mxu0 0.0
    %1630 = vmatpush1.msra.mxu0 0.0
    %1631 = vmatprep.subr.mxu0 0.0
    %1632 = vmatpush1.msra.mxu0 0.0
    %1633 = vmatprep.subr.mxu0 0.0
    %1634 = vmatpush1.msra.mxu0 0.0
    %1635 = vmatprep.subr.mxu0 0.0
    %1636 = vmatpush1.msra.mxu0 0.0
    %1637 = vmatprep.subr.mxu0 0.0
    %1638 = vmatpush1.msra.mxu0 0.0
    %1639 = vmatprep.subr.mxu0 0.0
    %1640 = vmatpush1.msra.mxu0 0.0
    %1641 = vmatprep.subr.mxu0 0.0
    %1642 = vmatpush1.msra.mxu0 0.0
    %1643 = vmatprep.subr.mxu0 0.0
    %1644 = vmatpush1.msra.mxu0 0.0
    %1645 = vmatprep.mubr.f32.mxu0 0.0
    %1646 = vmatmul.mubr.f32.gmra.mrb[0].mxu0 %v1576
    %v1647 = vpop.f32.mrb[0].mxu0
    %v1648 = vadd.f32 0.0, %v1647
    %v1649 = vpop.f32.mrb[0].mxu0
    %1650 = vmatprep.mubr.f32.mxu0 0.0
    %1651 = vmatmul.mubr.f32.gmra.mrb[0].mxu0 %v1579
    %v1652 = vpop.f32.mrb[0].mxu0
    %v1653 = vadd.f32 0.0, %v1652
    %v1654 = vpop.f32.mrb[0].mxu0
    %1655 = vdwg.mxu0
    %1656 = vrot.lane.b32.xlu0 %v325, 64
    %v1657 = vpop.permute.xlu0 %1656
    %1658 = vrot.lane.b32.xlu0 %v330, 64
    %v1659 = vpop.permute.xlu0 %1658
    %v1663 = vsel %vm524, %v1562, 0
    %v1666 = vsel %vm524, %v1563, 0
    %1668 = vmatprep.subr.mxu0 0.0
    %1669 = vmatpush1.msra.mxu0 %v1657
    %1670 = vmatprep.subr.mxu0 0.0
    %1671 = vmatpush1.msra.mxu0 %v1659
    %1672 = vmatprep.subr.mxu0 0.0
    %1673 = vmatpush1.msra.mxu0 0.0
    %1674 = vmatprep.subr.mxu0 0.0
    %1675 = vmatpush1.msra.mxu0 0.0
    %1676 = vmatprep.subr.mxu0 0.0
    %1677 = vmatpush1.msra.mxu0 0.0
    %1678 = vmatprep.subr.mxu0 0.0
    %1679 = vmatpush1.msra.mxu0 0.0
    %1680 = vmatprep.subr.mxu0 0.0
    %1681 = vmatpush1.msra.mxu0 0.0
    %1682 = vmatprep.subr.mxu0 0.0
    %1683 = vmatpush1.msra.mxu0 0.0
    %1684 = vmatprep.subr.mxu0 0.0
    %1685 = vmatpush1.msra.mxu0 0.0
    %1686 = vmatprep.subr.mxu0 0.0
    %1687 = vmatpush1.msra.mxu0 0.0
    %1688 = vmatprep.subr.mxu0 0.0
    %1689 = vmatpush1.msra.mxu0 0.0
    %1690 = vmatprep.subr.mxu0 0.0
    %1691 = vmatpush1.msra.mxu0 0.0
    %1692 = vmatprep.subr.mxu0 0.0
    %1693 = vmatpush1.msra.mxu0 0.0
    %1694 = vmatprep.subr.mxu0 0.0
    %1695 = vmatpush1.msra.mxu0 0.0
    %1696 = vmatprep.subr.mxu0 0.0
    %1697 = vmatpush1.msra.mxu0 0.0
    %1698 = vmatprep.subr.mxu0 0.0
    %1699 = vmatpush1.msra.mxu0 0.0
    %1700 = vmatprep.subr.mxu0 0.0
    %1701 = vmatpush1.msra.mxu0 0.0
    %1702 = vmatprep.subr.mxu0 0.0
    %1703 = vmatpush1.msra.mxu0 0.0
    %1704 = vmatprep.subr.mxu0 0.0
    %1705 = vmatpush1.msra.mxu0 0.0
    %1706 = vmatprep.subr.mxu0 0.0
    %1707 = vmatpush1.msra.mxu0 0.0
    %1708 = vmatprep.subr.mxu0 0.0
    %1709 = vmatpush1.msra.mxu0 0.0
    %1710 = vmatprep.subr.mxu0 0.0
    %1711 = vmatpush1.msra.mxu0 0.0
    %1712 = vmatprep.subr.mxu0 0.0
    %1713 = vmatpush1.msra.mxu0 0.0
    %1714 = vmatprep.subr.mxu0 0.0
    %1715 = vmatpush1.msra.mxu0 0.0
    %1716 = vmatprep.subr.mxu0 0.0
    %1717 = vmatpush1.msra.mxu0 0.0
    %1718 = vmatprep.subr.mxu0 0.0
    %1719 = vmatpush1.msra.mxu0 0.0
    %1720 = vmatprep.subr.mxu0 0.0
    %1721 = vmatpush1.msra.mxu0 0.0
    %1722 = vmatprep.subr.mxu0 0.0
    %1723 = vmatpush1.msra.mxu0 0.0
    %1724 = vmatprep.subr.mxu0 0.0
    %1725 = vmatpush1.msra.mxu0 0.0
    %1726 = vmatprep.subr.mxu0 0.0
    %1727 = vmatpush1.msra.mxu0 0.0
    %1728 = vmatprep.subr.mxu0 0.0
    %1729 = vmatpush1.msra.mxu0 0.0
    %1730 = vmatprep.subr.mxu0 0.0
    %1731 = vmatpush1.msra.mxu0 0.0
    %1732 = vmatprep.mubr.f32.mxu0 0.0
    %1733 = vmatmul.mubr.f32.gmra.mrb[0].mxu0 %v1663
    %v1734 = vpop.f32.mrb[0].mxu0
    %v1735 = vadd.f32 0.0, %v1734
    %v1736 = vpop.f32.mrb[0].mxu0
    %1737 = vmatprep.mubr.f32.mxu0 0.0
    %1738 = vmatmul.mubr.f32.gmra.mrb[0].mxu0 %v1666
    %v1739 = vpop.f32.mrb[0].mxu0
    %v1740 = vadd.f32 0.0, %v1739
    %v1741 = vpop.f32.mrb[0].mxu0
    %1742 = vdwg.mxu0
    %v1744 = vsel %vm349, %v1648, 0
    %v1747 = vsel %vm349, %v1653, 0
    %v1750 = vsel %vm349, %v1735, 0
    %v1753 = vsel %vm349, %v1740, 0
    %1755 = vmatprep.subr.mxu0 0.0
    %1756 = vmatpush1.msra.mxu0 %v341
    %1757 = vmatprep.subr.mxu0 0.0
    %1758 = vmatpush1.msra.mxu0 %v342
    %1759 = vmatprep.subr.mxu0 0.0
    %1760 = vmatpush1.msra.mxu0 %v343
    %1761 = vmatprep.subr.mxu0 0.0
    %1762 = vmatpush1.msra.mxu0 %v344
    %1763 = vmatprep.subr.mxu0 0.0
    %1764 = vmatpush1.msra.mxu0 0.0
    %1765 = vmatprep.subr.mxu0 0.0
    %1766 = vmatpush1.msra.mxu0 0.0
    %1767 = vmatprep.subr.mxu0 0.0
    %1768 = vmatpush1.msra.mxu0 0.0
    %1769 = vmatprep.subr.mxu0 0.0
    %1770 = vmatpush1.msra.mxu0 0.0
    %1771 = vmatprep.subr.mxu0 0.0
    %1772 = vmatpush1.msra.mxu0 0.0
    %1773 = vmatprep.subr.mxu0 0.0
    %1774 = vmatpush1.msra.mxu0 0.0
    %1775 = vmatprep.subr.mxu0 0.0
    %1776 = vmatpush1.msra.mxu0 0.0
    %1777 = vmatprep.subr.mxu0 0.0
    %1778 = vmatpush1.msra.mxu0 0.0
    %1779 = vmatprep.subr.mxu0 0.0
    %1780 = vmatpush1.msra.mxu0 0.0
    %1781 = vmatprep.subr.mxu0 0.0
    %1782 = vmatpush1.msra.mxu0 0.0
    %1783 = vmatprep.subr.mxu0 0.0
    %1784 = vmatpush1.msra.mxu0 0.0
    %1785 = vmatprep.subr.mxu0 0.0
    %1786 = vmatpush1.msra.mxu0 0.0
    %1787 = vmatprep.subr.mxu0 0.0
    %1788 = vmatpush1.msra.mxu0 0.0
    %1789 = vmatprep.subr.mxu0 0.0
    %1790 = vmatpush1.msra.mxu0 0.0
    %1791 = vmatprep.subr.mxu0 0.0
    %1792 = vmatpush1.msra.mxu0 0.0
    %1793 = vmatprep.subr.mxu0 0.0
    %1794 = vmatpush1.msra.mxu0 0.0
    %1795 = vmatprep.subr.mxu0 0.0
    %1796 = vmatpush1.msra.mxu0 0.0
    %1797 = vmatprep.subr.mxu0 0.0
    %1798 = vmatpush1.msra.mxu0 0.0
    %1799 = vmatprep.subr.mxu0 0.0
    %1800 = vmatpush1.msra.mxu0 0.0
    %1801 = vmatprep.subr.mxu0 0.0
    %1802 = vmatpush1.msra.mxu0 0.0
    %1803 = vmatprep.subr.mxu0 0.0
    %1804 = vmatpush1.msra.mxu0 0.0
    %1805 = vmatprep.subr.mxu0 0.0
    %1806 = vmatpush1.msra.mxu0 0.0
    %1807 = vmatprep.subr.mxu0 0.0
    %1808 = vmatpush1.msra.mxu0 0.0
    %1809 = vmatprep.subr.mxu0 0.0
    %1810 = vmatpush1.msra.mxu0 0.0
    %1811 = vmatprep.subr.mxu0 0.0
    %1812 = vmatpush1.msra.mxu0 0.0
    %1813 = vmatprep.subr.mxu0 0.0
    %1814 = vmatpush1.msra.mxu0 0.0
    %1815 = vmatprep.subr.mxu0 0.0
    %1816 = vmatpush1.msra.mxu0 0.0
    %1817 = vmatprep.subr.mxu0 0.0
    %1818 = vmatpush1.msra.mxu0 0.0
    %1819 = vmatprep.mubr.f32.mxu0 0.0
    %1820 = vmatmul.mubr.f32.gmra.mrb[0].mxu0 %v1744
    %v1821 = vpop.f32.mrb[0].mxu0
    %v1822 = vadd.f32 0.0, %v1821
    %v1823 = vpop.f32.mrb[0].mxu0
    %1824 = vmatprep.mubr.f32.mxu0 0.0
    %1825 = vmatmul.mubr.f32.gmra.mrb[0].mxu0 %v1747
    %v1826 = vpop.f32.mrb[0].mxu0
    %v1827 = vadd.f32 0.0, %v1826
    %v1828 = vpop.f32.mrb[0].mxu0
    %1829 = vmatprep.mubr.f32.mxu0 0.0
    %1830 = vmatmul.mubr.f32.gmra.mrb[0].mxu0 %v1750
    %v1831 = vpop.f32.mrb[0].mxu0
    %v1832 = vadd.f32 0.0, %v1831
    %v1833 = vpop.f32.mrb[0].mxu0
    %1834 = vmatprep.mubr.f32.mxu0 0.0
    %1835 = vmatmul.mubr.f32.gmra.mrb[0].mxu0 %v1753
    %v1836 = vpop.f32.mrb[0].mxu0
    %v1837 = vadd.f32 0.0, %v1836
    %v1838 = vpop.f32.mrb[0].mxu0
    %1839 = vdwg.mxu0
    %v1840 = vadd.f32 %v1320, %v1822
    %v1841 = vadd.f32 %v1325, %v1827
    %v1842 = vadd.f32 %v1330, %v1832
    %v1843 = vadd.f32 %v1335, %v1837
    %1844 = vrot.lane.b32.xlu0 %v214, 32
    %v1845 = vpop.permute.xlu0 %1844
    %1846 = vrot.lane.b32.xlu0 %v219, 32
    %v1847 = vpop.permute.xlu0 %1846
    %1848 = vrot.lane.b32.xlu0 %v113, 32
    %v1849 = vpop.permute.xlu0 %1848
    %1850 = vrot.lane.b32.xlu0 %v118, 32
    %v1851 = vpop.permute.xlu0 %1850
    %v1852 = vsel %vm349, %v1845, 0
    %v1854 = vsel %vm349, %v1847, 0
    %v1856 = vsel %vm349, %v1849, 0
    %v1858 = vsel %vm349, %v1851, 0
    %1860 = vmatprep.subr.mxu0 0.0
    %1861 = vmatpush1.xpose.msra.mxu0 %v1856
    %1862 = vmatprep.subr.mxu0 0.0
    %1863 = vmatpush1.xpose.msra.mxu0 %v1858
    %1864 = vmatprep.subr.mxu0 0.0
    %1865 = vmatpush1.xpose.msra.mxu0 0.0
    %1866 = vmatprep.subr.mxu0 0.0
    %1867 = vmatpush1.xpose.msra.mxu0 0.0
    %1868 = vmatprep.subr.mxu0 0.0
    %1869 = vmatpush1.xpose.msra.mxu0 0.0
    %1870 = vmatprep.subr.mxu0 0.0
    %1871 = vmatpush1.xpose.msra.mxu0 0.0
    %1872 = vmatprep.subr.mxu0 0.0
    %1873 = vmatpush1.xpose.msra.mxu0 0.0
    %1874 = vmatprep.subr.mxu0 0.0
    %1875 = vmatpush1.xpose.msra.mxu0 0.0
    %1876 = vmatprep.subr.mxu0 0.0
    %1877 = vmatpush1.xpose.msra.mxu0 0.0
    %1878 = vmatprep.subr.mxu0 0.0
    %1879 = vmatpush1.xpose.msra.mxu0 0.0
    %1880 = vmatprep.subr.mxu0 0.0
    %1881 = vmatpush1.xpose.msra.mxu0 0.0
    %1882 = vmatprep.subr.mxu0 0.0
    %1883 = vmatpush1.xpose.msra.mxu0 0.0
    %1884 = vmatprep.subr.mxu0 0.0
    %1885 = vmatpush1.xpose.msra.mxu0 0.0
    %1886 = vmatprep.subr.mxu0 0.0
    %1887 = vmatpush1.xpose.msra.mxu0 0.0
    %1888 = vmatprep.subr.mxu0 0.0
    %1889 = vmatpush1.xpose.msra.mxu0 0.0
    %1890 = vmatprep.subr.mxu0 0.0
    %1891 = vmatpush1.xpose.msra.mxu0 0.0
    %1892 = vmatprep.subr.mxu0 0.0
    %1893 = vmatpush1.xpose.msra.mxu0 0.0
    %1894 = vmatprep.subr.mxu0 0.0
    %1895 = vmatpush1.xpose.msra.mxu0 0.0
    %1896 = vmatprep.subr.mxu0 0.0
    %1897 = vmatpush1.xpose.msra.mxu0 0.0
    %1898 = vmatprep.subr.mxu0 0.0
    %1899 = vmatpush1.xpose.msra.mxu0 0.0
    %1900 = vmatprep.subr.mxu0 0.0
    %1901 = vmatpush1.xpose.msra.mxu0 0.0
    %1902 = vmatprep.subr.mxu0 0.0
    %1903 = vmatpush1.xpose.msra.mxu0 0.0
    %1904 = vmatprep.subr.mxu0 0.0
    %1905 = vmatpush1.xpose.msra.mxu0 0.0
    %1906 = vmatprep.subr.mxu0 0.0
    %1907 = vmatpush1.xpose.msra.mxu0 0.0
    %1908 = vmatprep.subr.mxu0 0.0
    %1909 = vmatpush1.xpose.msra.mxu0 0.0
    %1910 = vmatprep.subr.mxu0 0.0
    %1911 = vmatpush1.xpose.msra.mxu0 0.0
    %1912 = vmatprep.subr.mxu0 0.0
    %1913 = vmatpush1.xpose.msra.mxu0 0.0
    %1914 = vmatprep.subr.mxu0 0.0
    %1915 = vmatpush1.xpose.msra.mxu0 0.0
    %1916 = vmatprep.subr.mxu0 0.0
    %1917 = vmatpush1.xpose.msra.mxu0 0.0
    %1918 = vmatprep.subr.mxu0 0.0
    %1919 = vmatpush1.xpose.msra.mxu0 0.0
    %1920 = vmatprep.subr.mxu0 0.0
    %1921 = vmatpush1.xpose.msra.mxu0 0.0
    %1922 = vmatprep.subr.mxu0 0.0
    %1923 = vmatpush1.xpose.msra.mxu0 0.0
    %1924 = vmatprep.mubr.f32.mxu0 0.0
    %1925 = vmatmul.mubr.f32.gmra.mrb[0].mxu0 %v1852
    %v1926 = vpop.f32.mrb[0].mxu0
    %v1927 = vadd.f32 0.0, %v1926
    %v1928 = vpop.f32.mrb[0].mxu0
    %1929 = vmatprep.mubr.f32.mxu0 0.0
    %1930 = vmatmul.mubr.f32.gmra.mrb[0].mxu0 %v1854
    %v1931 = vpop.f32.mrb[0].mxu0
    %v1932 = vadd.f32 0.0, %v1931
    %v1933 = vpop.f32.mrb[0].mxu0
    %1934 = vdwg.mxu0
    %1935 = vrot.lane.b32.xlu0 %v224, 32
    %v1936 = vpop.permute.xlu0 %1935
    %1937 = vrot.lane.b32.xlu0 %v229, 32
    %v1938 = vpop.permute.xlu0 %1937
    %1939 = vrot.lane.b32.xlu0 %v123, 32
    %v1940 = vpop.permute.xlu0 %1939
    %1941 = vrot.lane.b32.xlu0 %v128, 32
    %v1942 = vpop.permute.xlu0 %1941
    %v1943 = vsel %vm349, %v1936, 0
    %v1945 = vsel %vm349, %v1938, 0
    %v1947 = vsel %vm349, %v1940, 0
    %v1949 = vsel %vm349, %v1942, 0
    %1951 = vmatprep.subr.mxu0 0.0
    %1952 = vmatpush1.xpose.msra.mxu0 %v1947
    %1953 = vmatprep.subr.mxu0 0.0
    %1954 = vmatpush1.xpose.msra.mxu0 %v1949
    %1955 = vmatprep.subr.mxu0 0.0
    %1956 = vmatpush1.xpose.msra.mxu0 0.0
    %1957 = vmatprep.subr.mxu0 0.0
    %1958 = vmatpush1.xpose.msra.mxu0 0.0
    %1959 = vmatprep.subr.mxu0 0.0
    %1960 = vmatpush1.xpose.msra.mxu0 0.0
    %1961 = vmatprep.subr.mxu0 0.0
    %1962 = vmatpush1.xpose.msra.mxu0 0.0
    %1963 = vmatprep.subr.mxu0 0.0
    %1964 = vmatpush1.xpose.msra.mxu0 0.0
    %1965 = vmatprep.subr.mxu0 0.0
    %1966 = vmatpush1.xpose.msra.mxu0 0.0
    %1967 = vmatprep.subr.mxu0 0.0
    %1968 = vmatpush1.xpose.msra.mxu0 0.0
    %1969 = vmatprep.subr.mxu0 0.0
    %1970 = vmatpush1.xpose.msra.mxu0 0.0
    %1971 = vmatprep.subr.mxu0 0.0
    %1972 = vmatpush1.xpose.msra.mxu0 0.0
    %1973 = vmatprep.subr.mxu0 0.0
    %1974 = vmatpush1.xpose.msra.mxu0 0.0
    %1975 = vmatprep.subr.mxu0 0.0
    %1976 = vmatpush1.xpose.msra.mxu0 0.0
    %1977 = vmatprep.subr.mxu0 0.0
    %1978 = vmatpush1.xpose.msra.mxu0 0.0
    %1979 = vmatprep.subr.mxu0 0.0
    %1980 = vmatpush1.xpose.msra.mxu0 0.0
    %1981 = vmatprep.subr.mxu0 0.0
    %1982 = vmatpush1.xpose.msra.mxu0 0.0
    %1983 = vmatprep.subr.mxu0 0.0
    %1984 = vmatpush1.xpose.msra.mxu0 0.0
    %1985 = vmatprep.subr.mxu0 0.0
    %1986 = vmatpush1.xpose.msra.mxu0 0.0
    %1987 = vmatprep.subr.mxu0 0.0
    %1988 = vmatpush1.xpose.msra.mxu0 0.0
    %1989 = vmatprep.subr.mxu0 0.0
    %1990 = vmatpush1.xpose.msra.mxu0 0.0
    %1991 = vmatprep.subr.mxu0 0.0
    %1992 = vmatpush1.xpose.msra.mxu0 0.0
    %1993 = vmatprep.subr.mxu0 0.0
    %1994 = vmatpush1.xpose.msra.mxu0 0.0
    %1995 = vmatprep.subr.mxu0 0.0
    %1996 = vmatpush1.xpose.msra.mxu0 0.0
    %1997 = vmatprep.subr.mxu0 0.0
    %1998 = vmatpush1.xpose.msra.mxu0 0.0
    %1999 = vmatprep.subr.mxu0 0.0
    %2000 = vmatpush1.xpose.msra.mxu0 0.0
    %2001 = vmatprep.subr.mxu0 0.0
    %2002 = vmatpush1.xpose.msra.mxu0 0.0
    %2003 = vmatprep.subr.mxu0 0.0
    %2004 = vmatpush1.xpose.msra.mxu0 0.0
    %2005 = vmatprep.subr.mxu0 0.0
    %2006 = vmatpush1.xpose.msra.mxu0 0.0
    %2007 = vmatprep.subr.mxu0 0.0
    %2008 = vmatpush1.xpose.msra.mxu0 0.0
    %2009 = vmatprep.subr.mxu0 0.0
    %2010 = vmatpush1.xpose.msra.mxu0 0.0
    %2011 = vmatprep.subr.mxu0 0.0
    %2012 = vmatpush1.xpose.msra.mxu0 0.0
    %2013 = vmatprep.subr.mxu0 0.0
    %2014 = vmatpush1.xpose.msra.mxu0 0.0
    %2015 = vmatprep.mubr.f32.mxu0 0.0
    %2016 = vmatmul.mubr.f32.gmra.mrb[0].mxu0 %v1943
    %v2017 = vpop.f32.mrb[0].mxu0
    %v2018 = vadd.f32 0.0, %v2017
    %v2019 = vpop.f32.mrb[0].mxu0
    %2020 = vmatprep.mubr.f32.mxu0 0.0
    %2021 = vmatmul.mubr.f32.gmra.mrb[0].mxu0 %v1945
    %v2022 = vpop.f32.mrb[0].mxu0
    %v2023 = vadd.f32 0.0, %v2022
    %v2024 = vpop.f32.mrb[0].mxu0
    %2025 = vdwg.mxu0
    %v2026 = vsel %vm524, %v1927, -inf
    %2027 = vmax.xlane.f32.xlu0 %v2026
    %v2028 = vpop.xlane.xlu0 %2027
    %v2029 = vsel %vm524, %v1932, -inf
    %2030 = vmax.xlane.f32.xlu0 %v2029
    %v2031 = vpop.xlane.xlu0 %2030
    %v2032 = vsel %vm524, %v2018, -inf
    %2033 = vmax.xlane.f32.xlu0 %v2032
    %v2034 = vpop.xlane.xlu0 %2033
    %v2035 = vsel %vm524, %v2023, -inf
    %2036 = vmax.xlane.f32.xlu0 %v2035
    %v2037 = vpop.xlane.xlu0 %2036
    %v2038 = vsub.f32 %v1927, %v2028
    %v2039 = vsub.f32 %v1932, %v2031
    %v2040 = vsub.f32 %v2018, %v2034
    %v2041 = vsub.f32 %v2023, %v2037
    %v2042 = vmul.f32 %v2038, 1.442695
    %v2043 = vpow.pop %v2042
    %v2044 = vmul.f32 %v2039, 1.442695
    %v2045 = vpow.pop %v2044
    %v2046 = vmul.f32 %v2040, 1.442695
    %v2047 = vpow.pop %v2046
    %v2048 = vmul.f32 %v2041, 1.442695
    %v2049 = vpow.pop %v2048
    %v2050 = vsel %vm524, %v2043, 0.0
    %2051 = vadd.xlane.f32.xlu0 %v2050
    %v2052 = vpop.xlane.xlu0 %2051
    %v2053 = vsel %vm524, %v2045, 0.0
    %2054 = vadd.xlane.f32.xlu0 %v2053
    %v2055 = vpop.xlane.xlu0 %2054
    %v2056 = vsel %vm524, %v2047, 0.0
    %2057 = vadd.xlane.f32.xlu0 %v2056
    %v2058 = vpop.xlane.xlu0 %2057
    %v2059 = vsel %vm524, %v2049, 0.0
    %2060 = vadd.xlane.f32.xlu0 %v2059
    %v2061 = vpop.xlane.xlu0 %2060
    %v2062 = vrcp.pop %v2052
    %v2063 = vrcp.pop %v2055
    %v2064 = vrcp.pop %v2058
    %v2065 = vrcp.pop %v2061
    %v2066 = vmul.f32 %v2043, %v2062
    %v2067 = vmul.f32 %v2045, %v2063
    %v2068 = vmul.f32 %v2047, %v2064
    %v2069 = vmul.f32 %v2049, %v2065
    %s2070 = scalar_lea.vmem %s7, 96
    %2071 = vst.msk [vmem:[%s2070] sm:$0xff] %vm524, %v2066
    %2072 = vst.msk [vmem:[%s2070 + $0x8] sm:$0xff] %vm524, %v2067
    %2073 = vst.msk [vmem:[%s2070 + $0x10] sm:$0xff] %vm524, %v2068
    %2074 = vst.msk [vmem:[%s2070 + $0x18] sm:$0xff] %vm524, %v2069
    %2075 = vrot.lane.b32.xlu0 %v315, 32
    %v2076 = vpop.permute.xlu0 %2075
    %2077 = vrot.lane.b32.xlu0 %v320, 32
    %v2078 = vpop.permute.xlu0 %2077
    %v2082 = vsel %vm524, %v2066, 0
    %v2085 = vsel %vm524, %v2067, 0
    %2087 = vmatprep.subr.mxu0 0.0
    %2088 = vmatpush1.msra.mxu0 %v2076
    %2089 = vmatprep.subr.mxu0 0.0
    %2090 = vmatpush1.msra.mxu0 %v2078
    %2091 = vmatprep.subr.mxu0 0.0
    %2092 = vmatpush1.msra.mxu0 0.0
    %2093 = vmatprep.subr.mxu0 0.0
    %2094 = vmatpush1.msra.mxu0 0.0
    %2095 = vmatprep.subr.mxu0 0.0
    %2096 = vmatpush1.msra.mxu0 0.0
    %2097 = vmatprep.subr.mxu0 0.0
    %2098 = vmatpush1.msra.mxu0 0.0
    %2099 = vmatprep.subr.mxu0 0.0
    %2100 = vmatpush1.msra.mxu0 0.0
    %2101 = vmatprep.subr.mxu0 0.0
    %2102 = vmatpush1.msra.mxu0 0.0
    %2103 = vmatprep.subr.mxu0 0.0
    %2104 = vmatpush1.msra.mxu0 0.0
    %2105 = vmatprep.subr.mxu0 0.0
    %2106 = vmatpush1.msra.mxu0 0.0
    %2107 = vmatprep.subr.mxu0 0.0
    %2108 = vmatpush1.msra.mxu0 0.0
    %2109 = vmatprep.subr.mxu0 0.0
    %2110 = vmatpush1.msra.mxu0 0.0
    %2111 = vmatprep.subr.mxu0 0.0
    %2112 = vmatpush1.msra.mxu0 0.0
    %2113 = vmatprep.subr.mxu0 0.0
    %2114 = vmatpush1.msra.mxu0 0.0
    %2115 = vmatprep.subr.mxu0 0.0
    %2116 = vmatpush1.msra.mxu0 0.0
    %2117 = vmatprep.subr.mxu0 0.0
    %2118 = vmatpush1.msra.mxu0 0.0
    %2119 = vmatprep.subr.mxu0 0.0
    %2120 = vmatpush1.msra.mxu0 0.0
    %2121 = vmatprep.subr.mxu0 0.0
    %2122 = vmatpush1.msra.mxu0 0.0
    %2123 = vmatprep.subr.mxu0 0.0
    %2124 = vmatpush1.msra.mxu0 0.0
    %2125 = vmatprep.subr.mxu0 0.0
    %2126 = vmatpush1.msra.mxu0 0.0
    %2127 = vmatprep.subr.mxu0 0.0
    %2128 = vmatpush1.msra.mxu0 0.0
    %2129 = vmatprep.subr.mxu0 0.0
    %2130 = vmatpush1.msra.mxu0 0.0
    %2131 = vmatprep.subr.mxu0 0.0
    %2132 = vmatpush1.msra.mxu0 0.0
    %2133 = vmatprep.subr.mxu0 0.0
    %2134 = vmatpush1.msra.mxu0 0.0
    %2135 = vmatprep.subr.mxu0 0.0
    %2136 = vmatpush1.msra.mxu0 0.0
    %2137 = vmatprep.subr.mxu0 0.0
    %2138 = vmatpush1.msra.mxu0 0.0
    %2139 = vmatprep.subr.mxu0 0.0
    %2140 = vmatpush1.msra.mxu0 0.0
    %2141 = vmatprep.subr.mxu0 0.0
    %2142 = vmatpush1.msra.mxu0 0.0
    %2143 = vmatprep.subr.mxu0 0.0
    %2144 = vmatpush1.msra.mxu0 0.0
    %2145 = vmatprep.subr.mxu0 0.0
    %2146 = vmatpush1.msra.mxu0 0.0
    %2147 = vmatprep.subr.mxu0 0.0
    %2148 = vmatpush1.msra.mxu0 0.0
    %2149 = vmatprep.subr.mxu0 0.0
    %2150 = vmatpush1.msra.mxu0 0.0
    %2151 = vmatprep.mubr.f32.mxu0 0.0
    %2152 = vmatmul.mubr.f32.gmra.mrb[0].mxu0 %v2082
    %v2153 = vpop.f32.mrb[0].mxu0
    %v2154 = vadd.f32 0.0, %v2153
    %v2155 = vpop.f32.mrb[0].mxu0
    %2156 = vmatprep.mubr.f32.mxu0 0.0
    %2157 = vmatmul.mubr.f32.gmra.mrb[0].mxu0 %v2085
    %v2158 = vpop.f32.mrb[0].mxu0
    %v2159 = vadd.f32 0.0, %v2158
    %v2160 = vpop.f32.mrb[0].mxu0
    %2161 = vdwg.mxu0
    %2162 = vrot.lane.b32.xlu0 %v325, 32
    %v2163 = vpop.permute.xlu0 %2162
    %2164 = vrot.lane.b32.xlu0 %v330, 32
    %v2165 = vpop.permute.xlu0 %2164
    %v2169 = vsel %vm524, %v2068, 0
    %v2172 = vsel %vm524, %v2069, 0
    %2174 = vmatprep.subr.mxu0 0.0
    %2175 = vmatpush1.msra.mxu0 %v2163
    %2176 = vmatprep.subr.mxu0 0.0
    %2177 = vmatpush1.msra.mxu0 %v2165
    %2178 = vmatprep.subr.mxu0 0.0
    %2179 = vmatpush1.msra.mxu0 0.0
    %2180 = vmatprep.subr.mxu0 0.0
    %2181 = vmatpush1.msra.mxu0 0.0
    %2182 = vmatprep.subr.mxu0 0.0
    %2183 = vmatpush1.msra.mxu0 0.0
    %2184 = vmatprep.subr.mxu0 0.0
    %2185 = vmatpush1.msra.mxu0 0.0
    %2186 = vmatprep.subr.mxu0 0.0
    %2187 = vmatpush1.msra.mxu0 0.0
    %2188 = vmatprep.subr.mxu0 0.0
    %2189 = vmatpush1.msra.mxu0 0.0
    %2190 = vmatprep.subr.mxu0 0.0
    %2191 = vmatpush1.msra.mxu0 0.0
    %2192 = vmatprep.subr.mxu0 0.0
    %2193 = vmatpush1.msra.mxu0 0.0
    %2194 = vmatprep.subr.mxu0 0.0
    %2195 = vmatpush1.msra.mxu0 0.0
    %2196 = vmatprep.subr.mxu0 0.0
    %2197 = vmatpush1.msra.mxu0 0.0
    %2198 = vmatprep.subr.mxu0 0.0
    %2199 = vmatpush1.msra.mxu0 0.0
    %2200 = vmatprep.subr.mxu0 0.0
    %2201 = vmatpush1.msra.mxu0 0.0
    %2202 = vmatprep.subr.mxu0 0.0
    %2203 = vmatpush1.msra.mxu0 0.0
    %2204 = vmatprep.subr.mxu0 0.0
    %2205 = vmatpush1.msra.mxu0 0.0
    %2206 = vmatprep.subr.mxu0 0.0
    %2207 = vmatpush1.msra.mxu0 0.0
    %2208 = vmatprep.subr.mxu0 0.0
    %2209 = vmatpush1.msra.mxu0 0.0
    %2210 = vmatprep.subr.mxu0 0.0
    %2211 = vmatpush1.msra.mxu0 0.0
    %2212 = vmatprep.subr.mxu0 0.0
    %2213 = vmatpush1.msra.mxu0 0.0
    %2214 = vmatprep.subr.mxu0 0.0
    %2215 = vmatpush1.msra.mxu0 0.0
    %2216 = vmatprep.subr.mxu0 0.0
    %2217 = vmatpush1.msra.mxu0 0.0
    %2218 = vmatprep.subr.mxu0 0.0
    %2219 = vmatpush1.msra.mxu0 0.0
    %2220 = vmatprep.subr.mxu0 0.0
    %2221 = vmatpush1.msra.mxu0 0.0
    %2222 = vmatprep.subr.mxu0 0.0
    %2223 = vmatpush1.msra.mxu0 0.0
    %2224 = vmatprep.subr.mxu0 0.0
    %2225 = vmatpush1.msra.mxu0 0.0
    %2226 = vmatprep.subr.mxu0 0.0
    %2227 = vmatpush1.msra.mxu0 0.0
    %2228 = vmatprep.subr.mxu0 0.0
    %2229 = vmatpush1.msra.mxu0 0.0
    %2230 = vmatprep.subr.mxu0 0.0
    %2231 = vmatpush1.msra.mxu0 0.0
    %2232 = vmatprep.subr.mxu0 0.0
    %2233 = vmatpush1.msra.mxu0 0.0
    %2234 = vmatprep.subr.mxu0 0.0
    %2235 = vmatpush1.msra.mxu0 0.0
    %2236 = vmatprep.subr.mxu0 0.0
    %2237 = vmatpush1.msra.mxu0 0.0
    %2238 = vmatprep.mubr.f32.mxu0 0.0
    %2239 = vmatmul.mubr.f32.gmra.mrb[0].mxu0 %v2169
    %v2240 = vpop.f32.mrb[0].mxu0
    %v2241 = vadd.f32 0.0, %v2240
    %v2242 = vpop.f32.mrb[0].mxu0
    %2243 = vmatprep.mubr.f32.mxu0 0.0
    %2244 = vmatmul.mubr.f32.gmra.mrb[0].mxu0 %v2172
    %v2245 = vpop.f32.mrb[0].mxu0
    %v2246 = vadd.f32 0.0, %v2245
    %v2247 = vpop.f32.mrb[0].mxu0
    %2248 = vdwg.mxu0
    %v2250 = vsel %vm349, %v2154, 0
    %v2253 = vsel %vm349, %v2159, 0
    %v2256 = vsel %vm349, %v2241, 0
    %v2259 = vsel %vm349, %v2246, 0
    %2261 = vmatprep.subr.mxu0 0.0
    %2262 = vmatpush1.msra.mxu0 %v345
    %2263 = vmatprep.subr.mxu0 0.0
    %2264 = vmatpush1.msra.mxu0 %v346
    %2265 = vmatprep.subr.mxu0 0.0
    %2266 = vmatpush1.msra.mxu0 %v347
    %2267 = vmatprep.subr.mxu0 0.0
    %2268 = vmatpush1.msra.mxu0 %v348
    %2269 = vmatprep.subr.mxu0 0.0
    %2270 = vmatpush1.msra.mxu0 0.0
    %2271 = vmatprep.subr.mxu0 0.0
    %2272 = vmatpush1.msra.mxu0 0.0
    %2273 = vmatprep.subr.mxu0 0.0
    %2274 = vmatpush1.msra.mxu0 0.0
    %2275 = vmatprep.subr.mxu0 0.0
    %2276 = vmatpush1.msra.mxu0 0.0
    %2277 = vmatprep.subr.mxu0 0.0
    %2278 = vmatpush1.msra.mxu0 0.0
    %2279 = vmatprep.subr.mxu0 0.0
    %2280 = vmatpush1.msra.mxu0 0.0
    %2281 = vmatprep.subr.mxu0 0.0
    %2282 = vmatpush1.msra.mxu0 0.0
    %2283 = vmatprep.subr.mxu0 0.0
    %2284 = vmatpush1.msra.mxu0 0.0
    %2285 = vmatprep.subr.mxu0 0.0
    %2286 = vmatpush1.msra.mxu0 0.0
    %2287 = vmatprep.subr.mxu0 0.0
    %2288 = vmatpush1.msra.mxu0 0.0
    %2289 = vmatprep.subr.mxu0 0.0
    %2290 = vmatpush1.msra.mxu0 0.0
    %2291 = vmatprep.subr.mxu0 0.0
    %2292 = vmatpush1.msra.mxu0 0.0
    %2293 = vmatprep.subr.mxu0 0.0
    %2294 = vmatpush1.msra.mxu0 0.0
    %2295 = vmatprep.subr.mxu0 0.0
    %2296 = vmatpush1.msra.mxu0 0.0
    %2297 = vmatprep.subr.mxu0 0.0
    %2298 = vmatpush1.msra.mxu0 0.0
    %2299 = vmatprep.subr.mxu0 0.0
    %2300 = vmatpush1.msra.mxu0 0.0
    %2301 = vmatprep.subr.mxu0 0.0
    %2302 = vmatpush1.msra.mxu0 0.0
    %2303 = vmatprep.subr.mxu0 0.0
    %2304 = vmatpush1.msra.mxu0 0.0
    %2305 = vmatprep.subr.mxu0 0.0
    %2306 = vmatpush1.msra.mxu0 0.0
    %2307 = vmatprep.subr.mxu0 0.0
    %2308 = vmatpush1.msra.mxu0 0.0
    %2309 = vmatprep.subr.mxu0 0.0
    %2310 = vmatpush1.msra.mxu0 0.0
    %2311 = vmatprep.subr.mxu0 0.0
    %2312 = vmatpush1.msra.mxu0 0.0
    %2313 = vmatprep.subr.mxu0 0.0
    %2314 = vmatpush1.msra.mxu0 0.0
    %2315 = vmatprep.subr.mxu0 0.0
    %2316 = vmatpush1.msra.mxu0 0.0
    %2317 = vmatprep.subr.mxu0 0.0
    %2318 = vmatpush1.msra.mxu0 0.0
    %2319 = vmatprep.subr.mxu0 0.0
    %2320 = vmatpush1.msra.mxu0 0.0
    %2321 = vmatprep.subr.mxu0 0.0
    %2322 = vmatpush1.msra.mxu0 0.0
    %2323 = vmatprep.subr.mxu0 0.0
    %2324 = vmatpush1.msra.mxu0 0.0
    %2325 = vmatprep.mubr.f32.mxu0 0.0
    %2326 = vmatmul.mubr.f32.gmra.mrb[0].mxu0 %v2250
    %v2327 = vpop.f32.mrb[0].mxu0
    %v2328 = vadd.f32 0.0, %v2327
    %v2329 = vpop.f32.mrb[0].mxu0
    %2330 = vmatprep.mubr.f32.mxu0 0.0
    %2331 = vmatmul.mubr.f32.gmra.mrb[0].mxu0 %v2253
    %v2332 = vpop.f32.mrb[0].mxu0
    %v2333 = vadd.f32 0.0, %v2332
    %v2334 = vpop.f32.mrb[0].mxu0
    %2335 = vmatprep.mubr.f32.mxu0 0.0
    %2336 = vmatmul.mubr.f32.gmra.mrb[0].mxu0 %v2256
    %v2337 = vpop.f32.mrb[0].mxu0
    %v2338 = vadd.f32 0.0, %v2337
    %v2339 = vpop.f32.mrb[0].mxu0
    %2340 = vmatprep.mubr.f32.mxu0 0.0
    %2341 = vmatmul.mubr.f32.gmra.mrb[0].mxu0 %v2259
    %v2342 = vpop.f32.mrb[0].mxu0
    %v2343 = vadd.f32 0.0, %v2342
    %v2344 = vpop.f32.mrb[0].mxu0
    %2345 = vdwg.mxu0
    %v2346 = vadd.f32 %v1840, %v2328
    %v2347 = vadd.f32 %v1841, %v2333
    %v2348 = vadd.f32 %v1842, %v2338
    %v2349 = vadd.f32 %v1843, %v2343
    %v2350 = vld [vmem:[%s5] sm:$0x1]
    %v2352 = vlaneseq
    %v2353 = vshrl.u32 %v2352, 7
    %v2354 = vsub.s32 0, %v2353
    %v2355 = vrot.slane %v2350, %v2354
    %v2357 = vadd.f32 %v2346, %v2355
    %v2358 = vadd.f32 %v2347, %v2355
    %v2359 = vadd.f32 %v2348, %v2355
    %v2360 = vadd.f32 %v2349, %v2355
    %2361 = vst [vmem:[#allocation2] sm:$0xff] %v2357
    %2362 = vst [vmem:[#allocation2 + $0x8] sm:$0xff] %v2358
    %2363 = vst [vmem:[#allocation2 + $0x10] sm:$0xff] %v2359
    %2364 = vst [vmem:[#allocation2 + $0x18] sm:$0xff] %v2360
    // Predicated region
    $region26: #{pseudo_mhsa_forward.1} parent=1 // pred_check
      _
    $region27: #{pseudo_mhsa_forward.1} parent=1 // pred_check_branch
      %2366 = sbr.rel (0) target = $region29
    $region28: #{pseudo_mhsa_forward.1} parent=1 // pred_region
      %s2368 = ssub.s32 512, 512
      %2369 = vsyncadd [#allocation3], %s2368
      %s2370 = sshll.u32 [#allocation2], 4
      %s2371 = int_to_ptr.vmem [resolvable:$true] %s2370
      %2376 = dma.vmem_to_hbm [thread:$0]  %s2371, 512, %s6, [#allocation3], 128, 128, 8
    $region29: #{pseudo_mhsa_forward.1} parent=1 // pred_fallthru
      _
    // Predicated region
    $region30: #{pseudo_mhsa_forward.1} parent=1 // pred_check
      _
    $region31: #{pseudo_mhsa_forward.1} parent=1 // pred_check_branch
      %2378 = sbr.rel (0) target = $region33
    $region32: #{pseudo_mhsa_forward.1} parent=1 // pred_region
      _
    $region33: #{pseudo_mhsa_forward.1} parent=1 // pred_fallthru
      _
    // Predicated region
    $region34: #{pseudo_mhsa_forward.1} parent=1 // pred_check
      _
    $region35: #{pseudo_mhsa_forward.1} parent=1 // pred_check_branch
      %2380 = sbr.rel (0) target = $region37
    $region36: #{pseudo_mhsa_forward.1} parent=1 // pred_region
      %2381 = dma.done [#allocation3], 512
    $region37: #{pseudo_mhsa_forward.1} parent=1 // pred_fallthru
      _
    // Predicated region
    $region38: #{pseudo_mhsa_forward.1} parent=1 // pred_check
      _
    $region39: #{pseudo_mhsa_forward.1} parent=1 // pred_check_branch
      %2383 = sbr.rel (0) target = $region41
    $region40: #{pseudo_mhsa_forward.1} parent=1 // pred_region
      _
    $region41: #{pseudo_mhsa_forward.1} parent=1 // pred_fallthru
      _
    %2384 = vsyncpa [#allocation3], 1

</llo_original>
